<compile_context>
chip_gen: v7x
topology: tpu7x:2x2x1
jax: 0.10.0
libtpu: 0.0.40
codegen_flags: <defaults>
</compile_context>

<pallas_src>
import functools

import jax
import jax.numpy as jnp
from jax import lax
from jax.experimental import pallas as pl
from jax.experimental.pallas import tpu as pltpu


def _round_up(x, m):
    return (x + m - 1) // m * m


def _make_crf_kernel(K, b_block, t_tile, use_mxu):
    """Build the kernel for a static (K, b_block, t_tile, path) configuration."""
    t_groups = t_tile // 8

    def run(logits_ref, tagmask_ref, trans_refs, out_ref,
            alpha_ref, score_ref, prev_oh_ref):
        t_blk = pl.program_id(1)
        n_t = pl.num_programs(1)

        # zero the carries at the start of every batch block's time sweep
        @pl.when(t_blk == 0)
        def _init():
            alpha_ref[...] = jnp.zeros_like(alpha_ref)
            score_ref[...] = jnp.zeros_like(score_ref)
            prev_oh_ref[...] = jnp.zeros_like(prev_oh_ref)

        # loop-invariant values hoisted out of the time loop
        iota_k = lax.broadcasted_iota(jnp.int32, (K, b_block), 0)   # tag ids / sublanes
        if use_mxu:
            exp_trans = trans_refs["exp_trans"][...]                # (Kp, Kn) exp(T - colmax)
            trans2d = trans_refs["trans2d"][...]                    # (Kp, Kn)
            tshift = jnp.broadcast_to(trans_refs["tshift"][...],
                                      (K, b_block))                 # (Kn, B) colmax, hoisted bcast
        else:
            trans3 = trans_refs["trans_bcast"][...]                 # (Kp, Kn, B), pre-broadcast

        def step(is_first, t_idx, tm_row, carry):
            alpha, score, prev_oh = carry
            emit = logits_ref[t_idx].astype(jnp.float32)            # (K, B)
            cur = tm_row                                            # (1, B) tag id, -1 = masked
            mt = cur >= 0                                           # (1, B) bool
            mtf = mt.astype(jnp.float32)
            oh_cur = (iota_k == cur).astype(jnp.float32)            # (K, B)

            # ---------- forward recursion (log denominator) ----------
            if use_mxu:
                # exp-domain MXU reformulation: K*B exps + K*B logs per step.
                c = jnp.max(alpha, axis=0, keepdims=True)           # (1, B)
                a_exp = jnp.exp(alpha - c)                          # (Kp, B)
                s = lax.dot_general(
                    exp_trans, a_exp,
                    dimension_numbers=(((0,), (0,)), ((), ())),
                    preferred_element_type=jnp.float32)             # (Kn, B)
                alpha_step = emit + c + tshift + jnp.log(s)
            else:
                # log-domain VPU path (K <= 8): small (Kp,Kn,B) tensor is fine.
                inner = alpha[:, None, :] + trans3                  # (Kp, Kn, B)
                m = jnp.max(inner, axis=0)                          # (Kn, B)
                alpha_step = emit + m + jnp.log(
                    jnp.sum(jnp.exp(inner - m[None]), axis=0))
            alpha_new = jnp.where(mt, alpha_step, alpha)
            if is_first is not None:                                # only step 0 of a group
                alpha_new = jnp.where(is_first, emit, alpha_new)

            # ---------- gold-path score (log numerator) ----------
            emit_sc = jnp.sum(emit * oh_cur, axis=0, keepdims=True)           # (1, B)
            if use_mxu:
                trans_row = lax.dot_general(
                    trans2d, prev_oh,
                    dimension_numbers=(((0,), (0,)), ((), ())),
                    preferred_element_type=jnp.float32)                       # (Kn, B)
            else:
                trans_row = jnp.sum(trans3 * prev_oh[:, None, :], axis=0)     # (Kn, B)
            trans_sc = jnp.sum(trans_row * oh_cur, axis=0, keepdims=True)     # (1, B)
            # prev_oh == 0 at global t == 0, so trans_sc is already 0 there.
            score_new = score + (emit_sc + trans_sc) * mtf

            return alpha_new, score_new, oh_cur

        def group(g, carry):
            # one dense (8, B) int32 load per 8 time steps; sublane index is static
            tm_grp = tagmask_ref[g]                                 # (8, B)
            for k in range(8):
                is_first = (jnp.logical_and(t_blk == 0, g == 0)
                            if k == 0 else None)
                carry = step(is_first, g * 8 + k, tm_grp[k:k + 1, :], carry)
            return carry

        carry0 = (alpha_ref[...], score_ref[...], prev_oh_ref[...])
        alpha, score, prev_oh = lax.fori_loop(0, t_groups, group, carry0)

        alpha_ref[...] = alpha
        score_ref[...] = score
        prev_oh_ref[...] = prev_oh

        @pl.when(t_blk == n_t - 1)
        def _finalize():
            m_f = jnp.max(alpha, axis=0, keepdims=True)                       # (1, B)
            log_denom = m_f + jnp.log(jnp.sum(jnp.exp(alpha - m_f),
                                              axis=0, keepdims=True))         # (1, B)
            out_ref[...] = (score - log_denom).reshape(1, 1, b_block)

    if use_mxu:
        def kernel(logits_ref, tagmask_ref, exp_trans_ref, tshift_ref,
                   trans2d_ref, out_ref, alpha_ref, score_ref, prev_oh_ref):
            run(logits_ref, tagmask_ref,
                {"exp_trans": exp_trans_ref, "tshift": tshift_ref,
                 "trans2d": trans2d_ref},
                out_ref, alpha_ref, score_ref, prev_oh_ref)
    else:
        def kernel(logits_ref, tagmask_ref, trans_bcast_ref,
                   out_ref, alpha_ref, score_ref, prev_oh_ref):
            run(logits_ref, tagmask_ref, {"trans_bcast": trans_bcast_ref},
                out_ref, alpha_ref, score_ref, prev_oh_ref)

    return kernel


def crf_forward(logits, tags, mask, transitions, *, t_tile=256,
                logits_dtype=None):
    """logits (B,T,K), tags (B,T), mask (B,T) -> scalar CRF log-likelihood.

    logits_dtype: optional streaming dtype for logits (e.g. jnp.bfloat16) to
    halve HBM traffic / VMEM; recursion math stays float32.
    """
    B, T, K = logits.shape
    use_mxu = K > 8   # log-domain VPU path for tiny K, exp-domain MXU otherwise

    stream_dtype = jnp.float32 if logits_dtype is None else logits_dtype
    # (B,T,K) -> (T,K,B): batch on lanes, tags on sublanes, time leading.
    # TODO(synk): this transpose is an extra HBM pass done by XLA before the
    # kernel; fuse into the logits producer if it shows up in profiles.
    logits_t = jnp.transpose(logits.astype(stream_dtype), (1, 2, 0))    # (T, K, B)

    # merged tag/mask stream: tag id where mask==1, -1 where masked
    merged = jnp.where(mask > 0, tags.astype(jnp.int32), -1)            # (B, T)
    merged_t = jnp.transpose(merged)                                    # (T, B)

    b_block = 128 if B >= 128 else B
    B_pad = _round_up(B, b_block)
    t_tile = min(int(t_tile), _round_up(T, 8))
    t_tile = _round_up(t_tile, 8)
    T_pad = _round_up(T, t_tile)

    logits_p = jnp.pad(logits_t, ((0, T_pad - T), (0, 0), (0, B_pad - B)))
    # pad merged with -1 so padded time steps / padded batch lanes are masked
    merged_p = jnp.pad(merged_t, ((0, T_pad - T), (0, B_pad - B)),
                       constant_values=-1)
    # pack 8 consecutive time steps onto sublanes -> no 8x sublane padding
    merged_p = merged_p.reshape(T_pad // 8, 8, B_pad)

    nb = B_pad // b_block
    nt = T_pad // t_tile
    t_groups = t_tile // 8

    transitions = transitions.astype(jnp.float32)

    in_arrays = [logits_p, merged_p]
    in_specs = [
        pl.BlockSpec((t_tile, K, b_block), lambda b, t: (t, 0, b)),
        pl.BlockSpec((t_groups, 8, b_block), lambda b, t: (t, 0, b)),
    ]
    if use_mxu:
        tshift = jnp.max(transitions, axis=0)                           # (Kn,)
        exp_trans = jnp.exp(transitions - tshift[None, :])              # (Kp, Kn)
        in_arrays += [exp_trans, tshift[:, None], transitions]
        in_specs += [
            pl.BlockSpec((K, K), lambda b, t: (0, 0)),
            pl.BlockSpec((K, 1), lambda b, t: (0, 0)),
            pl.BlockSpec((K, K), lambda b, t: (0, 0)),
        ]
    else:
        # broadcast to lanes ONCE in the wrapper (no in-kernel relayout)
        trans_bcast = jnp.broadcast_to(transitions[:, :, None],
                                       (K, K, b_block))
        in_arrays += [trans_bcast]
        in_specs += [pl.BlockSpec((K, K, b_block), lambda b, t: (0, 0, 0))]

    kernel = _make_crf_kernel(K, b_block, t_tile, use_mxu)

    out = pl.pallas_call(
        kernel,
        out_shape=jax.ShapeDtypeStruct((nb, 1, b_block), jnp.float32),
        grid_spec=pltpu.PrefetchScalarGridSpec(
            num_scalar_prefetch=0,
            grid=(nb, nt),
            in_specs=in_specs,
            out_specs=pl.BlockSpec((1, 1, b_block), lambda b, t: (b, 0, 0)),
            scratch_shapes=[
                pltpu.VMEM((K, b_block), jnp.float32),   # alpha carry
                pltpu.VMEM((1, b_block), jnp.float32),   # gold-path score carry
                pltpu.VMEM((K, b_block), jnp.float32),   # one-hot of previous tag
            ],
        ),
        compiler_params=pltpu.CompilerParams(
            dimension_semantics=("parallel", "arbitrary")),
    )(*in_arrays)

    # per-sequence log-likelihoods; padded batch lanes are dropped here
    return jnp.sum(out.reshape(-1)[:B])


def crf_reference(logits, tags, mask, transitions):
    """Pure-JAX replica of the PyTorch CRF.forward (include_start_end_transitions=False)."""
    logits = logits.astype(jnp.float32)
    maskf = mask.astype(jnp.float32)
    B, T, K = logits.shape
    alpha = logits[:, 0, :]
    for t in range(1, T):
        inner = alpha[:, :, None] + logits[:, t, None, :] + transitions[None, :, :]
        new = jax.scipy.special.logsumexp(inner, axis=1)
        alpha = new * maskf[:, t:t + 1] + alpha * (1.0 - maskf[:, t:t + 1])
    log_denom = jax.scipy.special.logsumexp(alpha, axis=-1)

    score = jnp.zeros((B,), jnp.float32)
    for t in range(T - 1):
        cur, nxt = tags[:, t], tags[:, t + 1]
        trans_sc = transitions[cur, nxt]
        emit_sc = jnp.take_along_axis(logits[:, t, :], cur[:, None], axis=1)[:, 0]
        score = score + trans_sc * maskf[:, t + 1] + emit_sc * maskf[:, t]
    last_idx = jnp.sum(maskf, axis=1).astype(jnp.int32) - 1
    last_tags = jnp.take_along_axis(tags, last_idx[:, None], axis=1)[:, 0]
    last_emit = jnp.take_along_axis(logits[:, -1, :], last_tags[:, None], axis=1)[:, 0]
    score = score + last_emit * maskf[:, -1]
    return jnp.sum(score - log_denom)


# TODO(synk): viterbi_tags (variable-length per-sequence Python-loop decode) has
# no clean single-kernel Pallas equivalent and is not part of forward(); omitted.

if __name__ == "__main__":
    key = jax.random.PRNGKey(0)

    def make_case(key, B, T, K, lens):
        k_logits, k_tags, k_trans, key = jax.random.split(key, 4)
        logits = jax.random.normal(k_logits, (B, T, K), dtype=jnp.float32)
        tags = jax.random.randint(k_tags, (B, T), 0, K, dtype=jnp.int32)
        mask = (jnp.arange(T)[None, :] < lens[:, None]).astype(jnp.int32)
        xavier_std = (2.0 / (K + K)) ** 0.5
        trans = xavier_std * jax.random.normal(k_trans, (K, K), dtype=jnp.float32)
        return key, logits, tags, mask, trans

    # ---- test 1: tiny, single time tile, VPU/log-domain path (K <= 8) ----
    key, logits, tags, mask, trans = make_case(
        key, 2, 8, 5, jnp.array([8, 6], dtype=jnp.int32))
    out = jax.block_until_ready(crf_forward(logits, tags, mask, trans))
    ref = crf_reference(logits, tags, mask, trans)
    assert jnp.allclose(out, ref, rtol=1e-4, atol=1e-4), (out, ref)

    # ---- test 2: multiple time tiles + T padding ----
    key, logits2, tags2, mask2, trans2 = make_case(
        key, 3, 13, 5, jnp.array([13, 7, 1], dtype=jnp.int32))
    out2 = jax.block_until_ready(
        crf_forward(logits2, tags2, mask2, trans2, t_tile=8))
    ref2 = crf_reference(logits2, tags2, mask2, trans2)
    assert jnp.allclose(out2, ref2, rtol=1e-4, atol=1e-4), (out2, ref2)

    # ---- test 3: B > 128 (two batch blocks, B not a multiple of 128) ----
    B3, T3 = 132, 12
    lens3 = (1 + (jnp.arange(B3) * 5) % T3).astype(jnp.int32)
    key, logits3, tags3, mask3, trans3 = make_case(key, B3, T3, 5, lens3)
    out3 = jax.block_until_ready(crf_forward(logits3, tags3, mask3, trans3))
    ref3 = crf_reference(logits3, tags3, mask3, trans3)
    assert jnp.allclose(out3, ref3, rtol=1e-4, atol=1e-4), (out3, ref3)

    # ---- test 4: larger K -> exp-domain MXU path ----
    key, logits4, tags4, mask4, trans4 = make_case(
        key, 4, 10, 24, jnp.array([10, 9, 4, 1], dtype=jnp.int32))
    out4 = jax.block_until_ready(crf_forward(logits4, tags4, mask4, trans4))
    ref4 = crf_reference(logits4, tags4, mask4, trans4)
    assert jnp.allclose(out4, ref4, rtol=1e-4, atol=1e-4), (out4, ref4)

    # ---- test 5: bf16-streamed logits (compare vs. reference on rounded logits) ----
    out5 = jax.block_until_ready(
        crf_forward(logits, tags, mask, trans, logits_dtype=jnp.bfloat16))
    ref5 = crf_reference(logits.astype(jnp.bfloat16).astype(jnp.float32),
                         tags, mask, trans)
    assert jnp.allclose(out5, ref5, rtol=1e-3, atol=1e-3), (out5, ref5)

    print("KERNEL_OK")
</pallas_src>

<mosaic_0001>
module attributes {stable_mosaic.version = 11 : i64} {
  func.func @kernel(%arg0: i32, %arg1: i32, %arg2: memref<8x5x2xf32, #tpu.memory_space<vmem>>, %arg3: memref<1x8x2xi32, #tpu.memory_space<vmem>>, %arg4: memref<5x5x2xf32, #tpu.memory_space<vmem>>, %arg5: memref<1x1x2xf32, #tpu.memory_space<vmem>>, %arg6: memref<5x2xf32, #tpu.memory_space<vmem>>, %arg7: memref<1x2xf32, #tpu.memory_space<vmem>>, %arg8: memref<5x2xf32, #tpu.memory_space<vmem>>) attributes {dimension_semantics = [#tpu.dimension_semantics<parallel>, #tpu.dimension_semantics<arbitrary>], iteration_bounds = array<i64: 1, 1>, scalar_prefetch = 0 : i64, scratch_operands = 3 : i64, tpu.core_type = #tpu.core_type<tc>, window_params = [{transform_indices = @transform_0, window_bounds = array<i64: 8, 5, 2>}, {transform_indices = @transform_1, window_bounds = array<i64: 1, 8, 2>}, {pipeline_mode = #tpu.pipeline_mode<synchronous>, transform_indices = @transform_2, window_bounds = array<i64: 5, 5, 2>}, {transform_indices = @transform_3, window_bounds = array<i64: 1, 1, 2>}]} {
    %c0_i32 = arith.constant 0 : i32
    %0 = arith.cmpi eq, %arg1, %c0_i32 : i32
    %1 = arith.extui %0 : i1 to i32
    %c0_i32_0 = arith.constant 0 : i32
    %2 = arith.cmpi ne, %1, %c0_i32_0 : i32
    scf.if %2 {
      %cst_94 = arith.constant 0.000000e+00 : f32
      %357 = vector.broadcast %cst_94 : f32 to vector<5x2xf32>
      %c0_95 = arith.constant 0 : index
      %c0_96 = arith.constant 0 : index
      %358 = vector.load %arg6[%c0_95, %c0_96] : memref<5x2xf32, #tpu.memory_space<vmem>>, vector<5x2xf32>
      tpu.vector_store %arg6[%c0_95, %c0_96], %357 {strides = array<i32>} : memref<5x2xf32, #tpu.memory_space<vmem>>, vector<5x2xf32>,
      %cst_97 = arith.constant 0.000000e+00 : f32
      %359 = vector.broadcast %cst_97 : f32 to vector<1x2xf32>
      %c0_98 = arith.constant 0 : index
      %c0_99 = arith.constant 0 : index
      %360 = vector.load %arg7[%c0_98, %c0_99] : memref<1x2xf32, #tpu.memory_space<vmem>>, vector<1x2xf32>
      tpu.vector_store %arg7[%c0_98, %c0_99], %359 {strides = array<i32>} : memref<1x2xf32, #tpu.memory_space<vmem>>, vector<1x2xf32>,
      %cst_100 = arith.constant 0.000000e+00 : f32
      %361 = vector.broadcast %cst_100 : f32 to vector<5x2xf32>
      %c0_101 = arith.constant 0 : index
      %c0_102 = arith.constant 0 : index
      %362 = vector.load %arg8[%c0_101, %c0_102] : memref<5x2xf32, #tpu.memory_space<vmem>>, vector<5x2xf32>
      tpu.vector_store %arg8[%c0_101, %c0_102], %361 {strides = array<i32>} : memref<5x2xf32, #tpu.memory_space<vmem>>, vector<5x2xf32>,
    } else {
    }
    %3 = tpu.iota {dimensions = array<i32: 0>} : vector<5x2xi32>
    %c0 = arith.constant 0 : index
    %c0_1 = arith.constant 0 : index
    %c0_2 = arith.constant 0 : index
    %4 = vector.load %arg4[%c0, %c0_1, %c0_2] : memref<5x5x2xf32, #tpu.memory_space<vmem>>, vector<5x5x2xf32>
    %c0_3 = arith.constant 0 : index
    %c0_4 = arith.constant 0 : index
    %5 = vector.load %arg6[%c0_3, %c0_4] : memref<5x2xf32, #tpu.memory_space<vmem>>, vector<5x2xf32>
    %c0_5 = arith.constant 0 : index
    %c0_6 = arith.constant 0 : index
    %6 = vector.load %arg7[%c0_5, %c0_6] : memref<1x2xf32, #tpu.memory_space<vmem>>, vector<1x2xf32>
    %c0_7 = arith.constant 0 : index
    %c0_8 = arith.constant 0 : index
    %7 = vector.load %arg8[%c0_7, %c0_8] : memref<5x2xf32, #tpu.memory_space<vmem>>, vector<5x2xf32>
    %c0_i32_9 = arith.constant 0 : i32
    %8 = arith.index_cast %c0_i32_9 : i32 to index
    %c0_10 = arith.constant 0 : index
    %c0_11 = arith.constant 0 : index
    %9 = vector.load %arg3[%8, %c0_10, %c0_11] : memref<1x8x2xi32, #tpu.memory_space<vmem>>, vector<1x8x2xi32>
    %10 = vector.shape_cast %9 : vector<1x8x2xi32> to vector<8x2xi32>
    %c0_i32_12 = arith.constant 0 : i32
    %11 = arith.cmpi eq, %arg1, %c0_i32_12 : i32
    %c0_i32_13 = arith.constant 0 : i32
    %12 = arith.cmpi eq, %c0_i32_9, %c0_i32_13 : i32
    %13 = arith.andi %11, %12 : i1
    %c8_i32 = arith.constant 8 : i32
    %14 = arith.muli %c0_i32_9, %c8_i32 : i32
    %c0_i32_14 = arith.constant 0 : i32
    %15 = arith.addi %14, %c0_i32_14 : i32
    %16 = vector.extract_strided_slice %10 {offsets = [0, 0], sizes = [1, 2], strides = [1, 1]} : vector<8x2xi32> to vector<1x2xi32>
    %17 = arith.index_cast %15 : i32 to index
    %c0_15 = arith.constant 0 : index
    %c0_16 = arith.constant 0 : index
    %18 = vector.load %arg2[%17, %c0_15, %c0_16] : memref<8x5x2xf32, #tpu.memory_space<vmem>>, vector<1x5x2xf32>
    %19 = vector.shape_cast %18 : vector<1x5x2xf32> to vector<5x2xf32>
    %c0_i32_17 = arith.constant 0 : i32
    %20 = vector.broadcast %c0_i32_17 : i32 to vector<1x2xi32>
    %21 = arith.cmpi sge, %16, %20 : vector<1x2xi32>
    %22 = arith.extui %21 : vector<1x2xi1> to vector<1x2xi32>
    %23 = arith.sitofp %22 : vector<1x2xi32> to vector<1x2xf32>
    %24 = vector.broadcast %16 : vector<1x2xi32> to vector<5x2xi32>
    %25 = arith.cmpi eq, %3, %24 : vector<5x2xi32>
    %26 = arith.extui %25 : vector<5x2xi1> to vector<5x2xi32>
    %27 = arith.sitofp %26 : vector<5x2xi32> to vector<5x2xf32>
    %28 = vector.shape_cast %5 : vector<5x2xf32> to vector<5x1x2xf32>
    %29 = vector.broadcast %28 : vector<5x1x2xf32> to vector<5x5x2xf32>
    %30 = arith.addf %29, %4 : vector<5x5x2xf32>
    %cst = arith.constant dense<0xFF800000> : vector<5x2xf32>
    %31 = vector.multi_reduction <maximumf>, %30, %cst [0] : vector<5x5x2xf32> to vector<5x2xf32>
    %32 = arith.addf %19, %31 : vector<5x2xf32>
    %33 = vector.shape_cast %31 : vector<5x2xf32> to vector<1x5x2xf32>
    %34 = vector.broadcast %33 : vector<1x5x2xf32> to vector<5x5x2xf32>
    %35 = arith.subf %30, %34 : vector<5x5x2xf32>
    %36 = math.exp %35 : vector<5x5x2xf32>
    %cst_18 = arith.constant dense<0.000000e+00> : vector<5x2xf32>
    %37 = vector.multi_reduction <add>, %36, %cst_18 [0] : vector<5x5x2xf32> to vector<5x2xf32>
    %38 = math.log %37 : vector<5x2xf32>
    %39 = arith.addf %32, %38 : vector<5x2xf32>
    %40 = vector.shape_cast %21 : vector<1x2xi1> to vector<1x2xi1>
    %41 = vector.broadcast %40 : vector<1x2xi1> to vector<5x2xi1>
    %42 = arith.select %41, %39, %5 : vector<5x2xi1>, vector<5x2xf32>
    %43 = arith.select %13, %19, %42 : vector<5x2xf32>
    %44 = arith.mulf %19, %27 : vector<5x2xf32>
    %cst_19 = arith.constant dense<0.000000e+00> : vector<2xf32>
    %45 = vector.multi_reduction <add>, %44, %cst_19 [0] : vector<5x2xf32> to vector<2xf32>
    %46 = vector.shape_cast %45 : vector<2xf32> to vector<1x2xf32>
    %47 = vector.shape_cast %7 : vector<5x2xf32> to vector<5x1x2xf32>
    %48 = vector.broadcast %47 : vector<5x1x2xf32> to vector<5x5x2xf32>
    %49 = arith.mulf %4, %48 : vector<5x5x2xf32>
    %cst_20 = arith.constant dense<0.000000e+00> : vector<5x2xf32>
    %50 = vector.multi_reduction <add>, %49, %cst_20 [0] : vector<5x5x2xf32> to vector<5x2xf32>
    %51 = arith.mulf %50, %27 : vector<5x2xf32>
    %cst_21 = arith.constant dense<0.000000e+00> : vector<2xf32>
    %52 = vector.multi_reduction <add>, %51, %cst_21 [0] : vector<5x2xf32> to vector<2xf32>
    %53 = vector.shape_cast %52 : vector<2xf32> to vector<1x2xf32>
    %54 = arith.addf %46, %53 : vector<1x2xf32>
    %55 = arith.mulf %54, %23 : vector<1x2xf32>
    %56 = arith.addf %6, %55 : vector<1x2xf32>
    %c8_i32_22 = arith.constant 8 : i32
    %57 = arith.muli %c0_i32_9, %c8_i32_22 : i32
    %c1_i32 = arith.constant 1 : i32
    %58 = arith.addi %57, %c1_i32 : i32
    %59 = vector.extract_strided_slice %10 {offsets = [1, 0], sizes = [1, 2], strides = [1, 1]} : vector<8x2xi32> to vector<1x2xi32>
    %60 = arith.index_cast %58 : i32 to index
    %c0_23 = arith.constant 0 : index
    %c0_24 = arith.constant 0 : index
    %61 = vector.load %arg2[%60, %c0_23, %c0_24] : memref<8x5x2xf32, #tpu.memory_space<vmem>>, vector<1x5x2xf32>
    %62 = vector.shape_cast %61 : vector<1x5x2xf32> to vector<5x2xf32>
    %c0_i32_25 = arith.constant 0 : i32
    %63 = vector.broadcast %c0_i32_25 : i32 to vector<1x2xi32>
    %64 = arith.cmpi sge, %59, %63 : vector<1x2xi32>
    %65 = arith.extui %64 : vector<1x2xi1> to vector<1x2xi32>
    %66 = arith.sitofp %65 : vector<1x2xi32> to vector<1x2xf32>
    %67 = vector.broadcast %59 : vector<1x2xi32> to vector<5x2xi32>
    %68 = arith.cmpi eq, %3, %67 : vector<5x2xi32>
    %69 = arith.extui %68 : vector<5x2xi1> to vector<5x2xi32>
    %70 = arith.sitofp %69 : vector<5x2xi32> to vector<5x2xf32>
    %71 = vector.shape_cast %43 : vector<5x2xf32> to vector<5x1x2xf32>
    %72 = vector.broadcast %71 : vector<5x1x2xf32> to vector<5x5x2xf32>
    %73 = arith.addf %72, %4 : vector<5x5x2xf32>
    %cst_26 = arith.constant dense<0xFF800000> : vector<5x2xf32>
    %74 = vector.multi_reduction <maximumf>, %73, %cst_26 [0] : vector<5x5x2xf32> to vector<5x2xf32>
    %75 = arith.addf %62, %74 : vector<5x2xf32>
    %76 = vector.shape_cast %74 : vector<5x2xf32> to vector<1x5x2xf32>
    %77 = vector.broadcast %76 : vector<1x5x2xf32> to vector<5x5x2xf32>
    %78 = arith.subf %73, %77 : vector<5x5x2xf32>
    %79 = math.exp %78 : vector<5x5x2xf32>
    %cst_27 = arith.constant dense<0.000000e+00> : vector<5x2xf32>
    %80 = vector.multi_reduction <add>, %79, %cst_27 [0] : vector<5x5x2xf32> to vector<5x2xf32>
    %81 = math.log %80 : vector<5x2xf32>
    %82 = arith.addf %75, %81 : vector<5x2xf32>
    %83 = vector.shape_cast %64 : vector<1x2xi1> to vector<1x2xi1>
    %84 = vector.broadcast %83 : vector<1x2xi1> to vector<5x2xi1>
    %85 = arith.select %84, %82, %43 : vector<5x2xi1>, vector<5x2xf32>
    %86 = arith.mulf %62, %70 : vector<5x2xf32>
    %cst_28 = arith.constant dense<0.000000e+00> : vector<2xf32>
    %87 = vector.multi_reduction <add>, %86, %cst_28 [0] : vector<5x2xf32> to vector<2xf32>
    %88 = vector.shape_cast %87 : vector<2xf32> to vector<1x2xf32>
    %89 = vector.shape_cast %27 : vector<5x2xf32> to vector<5x1x2xf32>
    %90 = vector.broadcast %89 : vector<5x1x2xf32> to vector<5x5x2xf32>
    %91 = arith.mulf %4, %90 : vector<5x5x2xf32>
    %cst_29 = arith.constant dense<0.000000e+00> : vector<5x2xf32>
    %92 = vector.multi_reduction <add>, %91, %cst_29 [0] : vector<5x5x2xf32> to vector<5x2xf32>
    %93 = arith.mulf %92, %70 : vector<5x2xf32>
    %cst_30 = arith.constant dense<0.000000e+00> : vector<2xf32>
    %94 = vector.multi_reduction <add>, %93, %cst_30 [0] : vector<5x2xf32> to vector<2xf32>
    %95 = vector.shape_cast %94 : vector<2xf32> to vector<1x2xf32>
    %96 = arith.addf %88, %95 : vector<1x2xf32>
    %97 = arith.mulf %96, %66 : vector<1x2xf32>
    %98 = arith.addf %56, %97 : vector<1x2xf32>
    %c8_i32_31 = arith.constant 8 : i32
    %99 = arith.muli %c0_i32_9, %c8_i32_31 : i32
    %c2_i32 = arith.constant 2 : i32
    %100 = arith.addi %99, %c2_i32 : i32
    %101 = vector.extract_strided_slice %10 {offsets = [2, 0], sizes = [1, 2], strides = [1, 1]} : vector<8x2xi32> to vector<1x2xi32>
    %102 = arith.index_cast %100 : i32 to index
    %c0_32 = arith.constant 0 : index
    %c0_33 = arith.constant 0 : index
    %103 = vector.load %arg2[%102, %c0_32, %c0_33] : memref<8x5x2xf32, #tpu.memory_space<vmem>>, vector<1x5x2xf32>
    %104 = vector.shape_cast %103 : vector<1x5x2xf32> to vector<5x2xf32>
    %c0_i32_34 = arith.constant 0 : i32
    %105 = vector.broadcast %c0_i32_34 : i32 to vector<1x2xi32>
    %106 = arith.cmpi sge, %101, %105 : vector<1x2xi32>
    %107 = arith.extui %106 : vector<1x2xi1> to vector<1x2xi32>
    %108 = arith.sitofp %107 : vector<1x2xi32> to vector<1x2xf32>
    %109 = vector.broadcast %101 : vector<1x2xi32> to vector<5x2xi32>
    %110 = arith.cmpi eq, %3, %109 : vector<5x2xi32>
    %111 = arith.extui %110 : vector<5x2xi1> to vector<5x2xi32>
    %112 = arith.sitofp %111 : vector<5x2xi32> to vector<5x2xf32>
    %113 = vector.shape_cast %85 : vector<5x2xf32> to vector<5x1x2xf32>
    %114 = vector.broadcast %113 : vector<5x1x2xf32> to vector<5x5x2xf32>
    %115 = arith.addf %114, %4 : vector<5x5x2xf32>
    %cst_35 = arith.constant dense<0xFF800000> : vector<5x2xf32>
    %116 = vector.multi_reduction <maximumf>, %115, %cst_35 [0] : vector<5x5x2xf32> to vector<5x2xf32>
    %117 = arith.addf %104, %116 : vector<5x2xf32>
    %118 = vector.shape_cast %116 : vector<5x2xf32> to vector<1x5x2xf32>
    %119 = vector.broadcast %118 : vector<1x5x2xf32> to vector<5x5x2xf32>
    %120 = arith.subf %115, %119 : vector<5x5x2xf32>
    %121 = math.exp %120 : vector<5x5x2xf32>
    %cst_36 = arith.constant dense<0.000000e+00> : vector<5x2xf32>
    %122 = vector.multi_reduction <add>, %121, %cst_36 [0] : vector<5x5x2xf32> to vector<5x2xf32>
    %123 = math.log %122 : vector<5x2xf32>
    %124 = arith.addf %117, %123 : vector<5x2xf32>
    %125 = vector.shape_cast %106 : vector<1x2xi1> to vector<1x2xi1>
    %126 = vector.broadcast %125 : vector<1x2xi1> to vector<5x2xi1>
    %127 = arith.select %126, %124, %85 : vector<5x2xi1>, vector<5x2xf32>
    %128 = arith.mulf %104, %112 : vector<5x2xf32>
    %cst_37 = arith.constant dense<0.000000e+00> : vector<2xf32>
    %129 = vector.multi_reduction <add>, %128, %cst_37 [0] : vector<5x2xf32> to vector<2xf32>
    %130 = vector.shape_cast %129 : vector<2xf32> to vector<1x2xf32>
    %131 = vector.shape_cast %70 : vector<5x2xf32> to vector<5x1x2xf32>
    %132 = vector.broadcast %131 : vector<5x1x2xf32> to vector<5x5x2xf32>
    %133 = arith.mulf %4, %132 : vector<5x5x2xf32>
    %cst_38 = arith.constant dense<0.000000e+00> : vector<5x2xf32>
    %134 = vector.multi_reduction <add>, %133, %cst_38 [0] : vector<5x5x2xf32> to vector<5x2xf32>
    %135 = arith.mulf %134, %112 : vector<5x2xf32>
    %cst_39 = arith.constant dense<0.000000e+00> : vector<2xf32>
    %136 = vector.multi_reduction <add>, %135, %cst_39 [0] : vector<5x2xf32> to vector<2xf32>
    %137 = vector.shape_cast %136 : vector<2xf32> to vector<1x2xf32>
    %138 = arith.addf %130, %137 : vector<1x2xf32>
    %139 = arith.mulf %138, %108 : vector<1x2xf32>
    %140 = arith.addf %98, %139 : vector<1x2xf32>
    %c8_i32_40 = arith.constant 8 : i32
    %141 = arith.muli %c0_i32_9, %c8_i32_40 : i32
    %c3_i32 = arith.constant 3 : i32
    %142 = arith.addi %141, %c3_i32 : i32
    %143 = vector.extract_strided_slice %10 {offsets = [3, 0], sizes = [1, 2], strides = [1, 1]} : vector<8x2xi32> to vector<1x2xi32>
    %144 = arith.index_cast %142 : i32 to index
    %c0_41 = arith.constant 0 : index
    %c0_42 = arith.constant 0 : index
    %145 = vector.load %arg2[%144, %c0_41, %c0_42] : memref<8x5x2xf32, #tpu.memory_space<vmem>>, vector<1x5x2xf32>
    %146 = vector.shape_cast %145 : vector<1x5x2xf32> to vector<5x2xf32>
    %c0_i32_43 = arith.constant 0 : i32
    %147 = vector.broadcast %c0_i32_43 : i32 to vector<1x2xi32>
    %148 = arith.cmpi sge, %143, %147 : vector<1x2xi32>
    %149 = arith.extui %148 : vector<1x2xi1> to vector<1x2xi32>
    %150 = arith.sitofp %149 : vector<1x2xi32> to vector<1x2xf32>
    %151 = vector.broadcast %143 : vector<1x2xi32> to vector<5x2xi32>
    %152 = arith.cmpi eq, %3, %151 : vector<5x2xi32>
    %153 = arith.extui %152 : vector<5x2xi1> to vector<5x2xi32>
    %154 = arith.sitofp %153 : vector<5x2xi32> to vector<5x2xf32>
    %155 = vector.shape_cast %127 : vector<5x2xf32> to vector<5x1x2xf32>
    %156 = vector.broadcast %155 : vector<5x1x2xf32> to vector<5x5x2xf32>
    %157 = arith.addf %156, %4 : vector<5x5x2xf32>
    %cst_44 = arith.constant dense<0xFF800000> : vector<5x2xf32>
    %158 = vector.multi_reduction <maximumf>, %157, %cst_44 [0] : vector<5x5x2xf32> to vector<5x2xf32>
    %159 = arith.addf %146, %158 : vector<5x2xf32>
    %160 = vector.shape_cast %158 : vector<5x2xf32> to vector<1x5x2xf32>
    %161 = vector.broadcast %160 : vector<1x5x2xf32> to vector<5x5x2xf32>
    %162 = arith.subf %157, %161 : vector<5x5x2xf32>
    %163 = math.exp %162 : vector<5x5x2xf32>
    %cst_45 = arith.constant dense<0.000000e+00> : vector<5x2xf32>
    %164 = vector.multi_reduction <add>, %163, %cst_45 [0] : vector<5x5x2xf32> to vector<5x2xf32>
    %165 = math.log %164 : vector<5x2xf32>
    %166 = arith.addf %159, %165 : vector<5x2xf32>
    %167 = vector.shape_cast %148 : vector<1x2xi1> to vector<1x2xi1>
    %168 = vector.broadcast %167 : vector<1x2xi1> to vector<5x2xi1>
    %169 = arith.select %168, %166, %127 : vector<5x2xi1>, vector<5x2xf32>
    %170 = arith.mulf %146, %154 : vector<5x2xf32>
    %cst_46 = arith.constant dense<0.000000e+00> : vector<2xf32>
    %171 = vector.multi_reduction <add>, %170, %cst_46 [0] : vector<5x2xf32> to vector<2xf32>
    %172 = vector.shape_cast %171 : vector<2xf32> to vector<1x2xf32>
    %173 = vector.shape_cast %112 : vector<5x2xf32> to vector<5x1x2xf32>
    %174 = vector.broadcast %173 : vector<5x1x2xf32> to vector<5x5x2xf32>
    %175 = arith.mulf %4, %174 : vector<5x5x2xf32>
    %cst_47 = arith.constant dense<0.000000e+00> : vector<5x2xf32>
    %176 = vector.multi_reduction <add>, %175, %cst_47 [0] : vector<5x5x2xf32> to vector<5x2xf32>
    %177 = arith.mulf %176, %154 : vector<5x2xf32>
    %cst_48 = arith.constant dense<0.000000e+00> : vector<2xf32>
    %178 = vector.multi_reduction <add>, %177, %cst_48 [0] : vector<5x2xf32> to vector<2xf32>
    %179 = vector.shape_cast %178 : vector<2xf32> to vector<1x2xf32>
    %180 = arith.addf %172, %179 : vector<1x2xf32>
    %181 = arith.mulf %180, %150 : vector<1x2xf32>
    %182 = arith.addf %140, %181 : vector<1x2xf32>
    %c8_i32_49 = arith.constant 8 : i32
    %183 = arith.muli %c0_i32_9, %c8_i32_49 : i32
    %c4_i32 = arith.constant 4 : i32
    %184 = arith.addi %183, %c4_i32 : i32
    %185 = vector.extract_strided_slice %10 {offsets = [4, 0], sizes = [1, 2], strides = [1, 1]} : vector<8x2xi32> to vector<1x2xi32>
    %186 = arith.index_cast %184 : i32 to index
    %c0_50 = arith.constant 0 : index
    %c0_51 = arith.constant 0 : index
    %187 = vector.load %arg2[%186, %c0_50, %c0_51] : memref<8x5x2xf32, #tpu.memory_space<vmem>>, vector<1x5x2xf32>
    %188 = vector.shape_cast %187 : vector<1x5x2xf32> to vector<5x2xf32>
    %c0_i32_52 = arith.constant 0 : i32
    %189 = vector.broadcast %c0_i32_52 : i32 to vector<1x2xi32>
    %190 = arith.cmpi sge, %185, %189 : vector<1x2xi32>
    %191 = arith.extui %190 : vector<1x2xi1> to vector<1x2xi32>
    %192 = arith.sitofp %191 : vector<1x2xi32> to vector<1x2xf32>
    %193 = vector.broadcast %185 : vector<1x2xi32> to vector<5x2xi32>
    %194 = arith.cmpi eq, %3, %193 : vector<5x2xi32>
    %195 = arith.extui %194 : vector<5x2xi1> to vector<5x2xi32>
    %196 = arith.sitofp %195 : vector<5x2xi32> to vector<5x2xf32>
    %197 = vector.shape_cast %169 : vector<5x2xf32> to vector<5x1x2xf32>
    %198 = vector.broadcast %197 : vector<5x1x2xf32> to vector<5x5x2xf32>
    %199 = arith.addf %198, %4 : vector<5x5x2xf32>
    %cst_53 = arith.constant dense<0xFF800000> : vector<5x2xf32>
    %200 = vector.multi_reduction <maximumf>, %199, %cst_53 [0] : vector<5x5x2xf32> to vector<5x2xf32>
    %201 = arith.addf %188, %200 : vector<5x2xf32>
    %202 = vector.shape_cast %200 : vector<5x2xf32> to vector<1x5x2xf32>
    %203 = vector.broadcast %202 : vector<1x5x2xf32> to vector<5x5x2xf32>
    %204 = arith.subf %199, %203 : vector<5x5x2xf32>
    %205 = math.exp %204 : vector<5x5x2xf32>
    %cst_54 = arith.constant dense<0.000000e+00> : vector<5x2xf32>
    %206 = vector.multi_reduction <add>, %205, %cst_54 [0] : vector<5x5x2xf32> to vector<5x2xf32>
    %207 = math.log %206 : vector<5x2xf32>
    %208 = arith.addf %201, %207 : vector<5x2xf32>
    %209 = vector.shape_cast %190 : vector<1x2xi1> to vector<1x2xi1>
    %210 = vector.broadcast %209 : vector<1x2xi1> to vector<5x2xi1>
    %211 = arith.select %210, %208, %169 : vector<5x2xi1>, vector<5x2xf32>
    %212 = arith.mulf %188, %196 : vector<5x2xf32>
    %cst_55 = arith.constant dense<0.000000e+00> : vector<2xf32>
    %213 = vector.multi_reduction <add>, %212, %cst_55 [0] : vector<5x2xf32> to vector<2xf32>
    %214 = vector.shape_cast %213 : vector<2xf32> to vector<1x2xf32>
    %215 = vector.shape_cast %154 : vector<5x2xf32> to vector<5x1x2xf32>
    %216 = vector.broadcast %215 : vector<5x1x2xf32> to vector<5x5x2xf32>
    %217 = arith.mulf %4, %216 : vector<5x5x2xf32>
    %cst_56 = arith.constant dense<0.000000e+00> : vector<5x2xf32>
    %218 = vector.multi_reduction <add>, %217, %cst_56 [0] : vector<5x5x2xf32> to vector<5x2xf32>
    %219 = arith.mulf %218, %196 : vector<5x2xf32>
    %cst_57 = arith.constant dense<0.000000e+00> : vector<2xf32>
    %220 = vector.multi_reduction <add>, %219, %cst_57 [0] : vector<5x2xf32> to vector<2xf32>
    %221 = vector.shape_cast %220 : vector<2xf32> to vector<1x2xf32>
    %222 = arith.addf %214, %221 : vector<1x2xf32>
    %223 = arith.mulf %222, %192 : vector<1x2xf32>
    %224 = arith.addf %182, %223 : vector<1x2xf32>
    %c8_i32_58 = arith.constant 8 : i32
    %225 = arith.muli %c0_i32_9, %c8_i32_58 : i32
    %c5_i32 = arith.constant 5 : i32
    %226 = arith.addi %225, %c5_i32 : i32
    %227 = vector.extract_strided_slice %10 {offsets = [5, 0], sizes = [1, 2], strides = [1, 1]} : vector<8x2xi32> to vector<1x2xi32>
    %228 = arith.index_cast %226 : i32 to index
    %c0_59 = arith.constant 0 : index
    %c0_60 = arith.constant 0 : index
    %229 = vector.load %arg2[%228, %c0_59, %c0_60] : memref<8x5x2xf32, #tpu.memory_space<vmem>>, vector<1x5x2xf32>
    %230 = vector.shape_cast %229 : vector<1x5x2xf32> to vector<5x2xf32>
    %c0_i32_61 = arith.constant 0 : i32
    %231 = vector.broadcast %c0_i32_61 : i32 to vector<1x2xi32>
    %232 = arith.cmpi sge, %227, %231 : vector<1x2xi32>
    %233 = arith.extui %232 : vector<1x2xi1> to vector<1x2xi32>
    %234 = arith.sitofp %233 : vector<1x2xi32> to vector<1x2xf32>
    %235 = vector.broadcast %227 : vector<1x2xi32> to vector<5x2xi32>
    %236 = arith.cmpi eq, %3, %235 : vector<5x2xi32>
    %237 = arith.extui %236 : vector<5x2xi1> to vector<5x2xi32>
    %238 = arith.sitofp %237 : vector<5x2xi32> to vector<5x2xf32>
    %239 = vector.shape_cast %211 : vector<5x2xf32> to vector<5x1x2xf32>
    %240 = vector.broadcast %239 : vector<5x1x2xf32> to vector<5x5x2xf32>
    %241 = arith.addf %240, %4 : vector<5x5x2xf32>
    %cst_62 = arith.constant dense<0xFF800000> : vector<5x2xf32>
    %242 = vector.multi_reduction <maximumf>, %241, %cst_62 [0] : vector<5x5x2xf32> to vector<5x2xf32>
    %243 = arith.addf %230, %242 : vector<5x2xf32>
    %244 = vector.shape_cast %242 : vector<5x2xf32> to vector<1x5x2xf32>
    %245 = vector.broadcast %244 : vector<1x5x2xf32> to vector<5x5x2xf32>
    %246 = arith.subf %241, %245 : vector<5x5x2xf32>
    %247 = math.exp %246 : vector<5x5x2xf32>
    %cst_63 = arith.constant dense<0.000000e+00> : vector<5x2xf32>
    %248 = vector.multi_reduction <add>, %247, %cst_63 [0] : vector<5x5x2xf32> to vector<5x2xf32>
    %249 = math.log %248 : vector<5x2xf32>
    %250 = arith.addf %243, %249 : vector<5x2xf32>
    %251 = vector.shape_cast %232 : vector<1x2xi1> to vector<1x2xi1>
    %252 = vector.broadcast %251 : vector<1x2xi1> to vector<5x2xi1>
    %253 = arith.select %252, %250, %211 : vector<5x2xi1>, vector<5x2xf32>
    %254 = arith.mulf %230, %238 : vector<5x2xf32>
    %cst_64 = arith.constant dense<0.000000e+00> : vector<2xf32>
    %255 = vector.multi_reduction <add>, %254, %cst_64 [0] : vector<5x2xf32> to vector<2xf32>
    %256 = vector.shape_cast %255 : vector<2xf32> to vector<1x2xf32>
    %257 = vector.shape_cast %196 : vector<5x2xf32> to vector<5x1x2xf32>
    %258 = vector.broadcast %257 : vector<5x1x2xf32> to vector<5x5x2xf32>
    %259 = arith.mulf %4, %258 : vector<5x5x2xf32>
    %cst_65 = arith.constant dense<0.000000e+00> : vector<5x2xf32>
    %260 = vector.multi_reduction <add>, %259, %cst_65 [0] : vector<5x5x2xf32> to vector<5x2xf32>
    %261 = arith.mulf %260, %238 : vector<5x2xf32>
    %cst_66 = arith.constant dense<0.000000e+00> : vector<2xf32>
    %262 = vector.multi_reduction <add>, %261, %cst_66 [0] : vector<5x2xf32> to vector<2xf32>
    %263 = vector.shape_cast %262 : vector<2xf32> to vector<1x2xf32>
    %264 = arith.addf %256, %263 : vector<1x2xf32>
    %265 = arith.mulf %264, %234 : vector<1x2xf32>
    %266 = arith.addf %224, %265 : vector<1x2xf32>
    %c8_i32_67 = arith.constant 8 : i32
    %267 = arith.muli %c0_i32_9, %c8_i32_67 : i32
    %c6_i32 = arith.constant 6 : i32
    %268 = arith.addi %267, %c6_i32 : i32
    %269 = vector.extract_strided_slice %10 {offsets = [6, 0], sizes = [1, 2], strides = [1, 1]} : vector<8x2xi32> to vector<1x2xi32>
    %270 = arith.index_cast %268 : i32 to index
    %c0_68 = arith.constant 0 : index
    %c0_69 = arith.constant 0 : index
    %271 = vector.load %arg2[%270, %c0_68, %c0_69] : memref<8x5x2xf32, #tpu.memory_space<vmem>>, vector<1x5x2xf32>
    %272 = vector.shape_cast %271 : vector<1x5x2xf32> to vector<5x2xf32>
    %c0_i32_70 = arith.constant 0 : i32
    %273 = vector.broadcast %c0_i32_70 : i32 to vector<1x2xi32>
    %274 = arith.cmpi sge, %269, %273 : vector<1x2xi32>
    %275 = arith.extui %274 : vector<1x2xi1> to vector<1x2xi32>
    %276 = arith.sitofp %275 : vector<1x2xi32> to vector<1x2xf32>
    %277 = vector.broadcast %269 : vector<1x2xi32> to vector<5x2xi32>
    %278 = arith.cmpi eq, %3, %277 : vector<5x2xi32>
    %279 = arith.extui %278 : vector<5x2xi1> to vector<5x2xi32>
    %280 = arith.sitofp %279 : vector<5x2xi32> to vector<5x2xf32>
    %281 = vector.shape_cast %253 : vector<5x2xf32> to vector<5x1x2xf32>
    %282 = vector.broadcast %281 : vector<5x1x2xf32> to vector<5x5x2xf32>
    %283 = arith.addf %282, %4 : vector<5x5x2xf32>
    %cst_71 = arith.constant dense<0xFF800000> : vector<5x2xf32>
    %284 = vector.multi_reduction <maximumf>, %283, %cst_71 [0] : vector<5x5x2xf32> to vector<5x2xf32>
    %285 = arith.addf %272, %284 : vector<5x2xf32>
    %286 = vector.shape_cast %284 : vector<5x2xf32> to vector<1x5x2xf32>
    %287 = vector.broadcast %286 : vector<1x5x2xf32> to vector<5x5x2xf32>
    %288 = arith.subf %283, %287 : vector<5x5x2xf32>
    %289 = math.exp %288 : vector<5x5x2xf32>
    %cst_72 = arith.constant dense<0.000000e+00> : vector<5x2xf32>
    %290 = vector.multi_reduction <add>, %289, %cst_72 [0] : vector<5x5x2xf32> to vector<5x2xf32>
    %291 = math.log %290 : vector<5x2xf32>
    %292 = arith.addf %285, %291 : vector<5x2xf32>
    %293 = vector.shape_cast %274 : vector<1x2xi1> to vector<1x2xi1>
    %294 = vector.broadcast %293 : vector<1x2xi1> to vector<5x2xi1>
    %295 = arith.select %294, %292, %253 : vector<5x2xi1>, vector<5x2xf32>
    %296 = arith.mulf %272, %280 : vector<5x2xf32>
    %cst_73 = arith.constant dense<0.000000e+00> : vector<2xf32>
    %297 = vector.multi_reduction <add>, %296, %cst_73 [0] : vector<5x2xf32> to vector<2xf32>
    %298 = vector.shape_cast %297 : vector<2xf32> to vector<1x2xf32>
    %299 = vector.shape_cast %238 : vector<5x2xf32> to vector<5x1x2xf32>
    %300 = vector.broadcast %299 : vector<5x1x2xf32> to vector<5x5x2xf32>
    %301 = arith.mulf %4, %300 : vector<5x5x2xf32>
    %cst_74 = arith.constant dense<0.000000e+00> : vector<5x2xf32>
    %302 = vector.multi_reduction <add>, %301, %cst_74 [0] : vector<5x5x2xf32> to vector<5x2xf32>
    %303 = arith.mulf %302, %280 : vector<5x2xf32>
    %cst_75 = arith.constant dense<0.000000e+00> : vector<2xf32>
    %304 = vector.multi_reduction <add>, %303, %cst_75 [0] : vector<5x2xf32> to vector<2xf32>
    %305 = vector.shape_cast %304 : vector<2xf32> to vector<1x2xf32>
    %306 = arith.addf %298, %305 : vector<1x2xf32>
    %307 = arith.mulf %306, %276 : vector<1x2xf32>
    %308 = arith.addf %266, %307 : vector<1x2xf32>
    %c8_i32_76 = arith.constant 8 : i32
    %309 = arith.muli %c0_i32_9, %c8_i32_76 : i32
    %c7_i32 = arith.constant 7 : i32
    %310 = arith.addi %309, %c7_i32 : i32
    %311 = vector.extract_strided_slice %10 {offsets = [7, 0], sizes = [1, 2], strides = [1, 1]} : vector<8x2xi32> to vector<1x2xi32>
    %312 = arith.index_cast %310 : i32 to index
    %c0_77 = arith.constant 0 : index
    %c0_78 = arith.constant 0 : index
    %313 = vector.load %arg2[%312, %c0_77, %c0_78] : memref<8x5x2xf32, #tpu.memory_space<vmem>>, vector<1x5x2xf32>
    %314 = vector.shape_cast %313 : vector<1x5x2xf32> to vector<5x2xf32>
    %c0_i32_79 = arith.constant 0 : i32
    %315 = vector.broadcast %c0_i32_79 : i32 to vector<1x2xi32>
    %316 = arith.cmpi sge, %311, %315 : vector<1x2xi32>
    %317 = arith.extui %316 : vector<1x2xi1> to vector<1x2xi32>
    %318 = arith.sitofp %317 : vector<1x2xi32> to vector<1x2xf32>
    %319 = vector.broadcast %311 : vector<1x2xi32> to vector<5x2xi32>
    %320 = arith.cmpi eq, %3, %319 : vector<5x2xi32>
    %321 = arith.extui %320 : vector<5x2xi1> to vector<5x2xi32>
    %322 = arith.sitofp %321 : vector<5x2xi32> to vector<5x2xf32>
    %323 = vector.shape_cast %295 : vector<5x2xf32> to vector<5x1x2xf32>
    %324 = vector.broadcast %323 : vector<5x1x2xf32> to vector<5x5x2xf32>
    %325 = arith.addf %324, %4 : vector<5x5x2xf32>
    %cst_80 = arith.constant dense<0xFF800000> : vector<5x2xf32>
    %326 = vector.multi_reduction <maximumf>, %325, %cst_80 [0] : vector<5x5x2xf32> to vector<5x2xf32>
    %327 = arith.addf %314, %326 : vector<5x2xf32>
    %328 = vector.shape_cast %326 : vector<5x2xf32> to vector<1x5x2xf32>
    %329 = vector.broadcast %328 : vector<1x5x2xf32> to vector<5x5x2xf32>
    %330 = arith.subf %325, %329 : vector<5x5x2xf32>
    %331 = math.exp %330 : vector<5x5x2xf32>
    %cst_81 = arith.constant dense<0.000000e+00> : vector<5x2xf32>
    %332 = vector.multi_reduction <add>, %331, %cst_81 [0] : vector<5x5x2xf32> to vector<5x2xf32>
    %333 = math.log %332 : vector<5x2xf32>
    %334 = arith.addf %327, %333 : vector<5x2xf32>
    %335 = vector.shape_cast %316 : vector<1x2xi1> to vector<1x2xi1>
    %336 = vector.broadcast %335 : vector<1x2xi1> to vector<5x2xi1>
    %337 = arith.select %336, %334, %295 : vector<5x2xi1>, vector<5x2xf32>
    %338 = arith.mulf %314, %322 : vector<5x2xf32>
    %cst_82 = arith.constant dense<0.000000e+00> : vector<2xf32>
    %339 = vector.multi_reduction <add>, %338, %cst_82 [0] : vector<5x2xf32> to vector<2xf32>
    %340 = vector.shape_cast %339 : vector<2xf32> to vector<1x2xf32>
    %341 = vector.shape_cast %280 : vector<5x2xf32> to vector<5x1x2xf32>
    %342 = vector.broadcast %341 : vector<5x1x2xf32> to vector<5x5x2xf32>
    %343 = arith.mulf %4, %342 : vector<5x5x2xf32>
    %cst_83 = arith.constant dense<0.000000e+00> : vector<5x2xf32>
    %344 = vector.multi_reduction <add>, %343, %cst_83 [0] : vector<5x5x2xf32> to vector<5x2xf32>
    %345 = arith.mulf %344, %322 : vector<5x2xf32>
    %cst_84 = arith.constant dense<0.000000e+00> : vector<2xf32>
    %346 = vector.multi_reduction <add>, %345, %cst_84 [0] : vector<5x2xf32> to vector<2xf32>
    %347 = vector.shape_cast %346 : vector<2xf32> to vector<1x2xf32>
    %348 = arith.addf %340, %347 : vector<1x2xf32>
    %349 = arith.mulf %348, %318 : vector<1x2xf32>
    %350 = arith.addf %308, %349 : vector<1x2xf32>
    %c1_i32_85 = arith.constant 1 : i32
    %c0_86 = arith.constant 0 : index
    %c0_87 = arith.constant 0 : index
    %351 = vector.load %arg6[%c0_86, %c0_87] : memref<5x2xf32, #tpu.memory_space<vmem>>, vector<5x2xf32>
    tpu.vector_store %arg6[%c0_86, %c0_87], %337 {strides = array<i32>} : memref<5x2xf32, #tpu.memory_space<vmem>>, vector<5x2xf32>,
    %c0_88 = arith.constant 0 : index
    %c0_89 = arith.constant 0 : index
    %352 = vector.load %arg7[%c0_88, %c0_89] : memref<1x2xf32, #tpu.memory_space<vmem>>, vector<1x2xf32>
    tpu.vector_store %arg7[%c0_88, %c0_89], %350 {strides = array<i32>} : memref<1x2xf32, #tpu.memory_space<vmem>>, vector<1x2xf32>,
    %c0_90 = arith.constant 0 : index
    %c0_91 = arith.constant 0 : index
    %353 = vector.load %arg8[%c0_90, %c0_91] : memref<5x2xf32, #tpu.memory_space<vmem>>, vector<5x2xf32>
    tpu.vector_store %arg8[%c0_90, %c0_91], %322 {strides = array<i32>} : memref<5x2xf32, #tpu.memory_space<vmem>>, vector<5x2xf32>,
    %c0_i32_92 = arith.constant 0 : i32
    %354 = arith.cmpi eq, %arg1, %c0_i32_92 : i32
    %355 = arith.extui %354 : i1 to i32
    %c0_i32_93 = arith.constant 0 : i32
    %356 = arith.cmpi ne, %355, %c0_i32_93 : i32
    scf.if %356 {
      %cst_94 = arith.constant dense<0xFF800000> : vector<2xf32>
      %357 = vector.multi_reduction <maximumf>, %337, %cst_94 [0] : vector<5x2xf32> to vector<2xf32>
      %358 = vector.shape_cast %357 : vector<2xf32> to vector<1x2xf32>
      %359 = vector.broadcast %358 : vector<1x2xf32> to vector<5x2xf32>
      %360 = arith.subf %337, %359 : vector<5x2xf32>
      %361 = math.exp %360 : vector<5x2xf32>
      %cst_95 = arith.constant dense<0.000000e+00> : vector<2xf32>
      %362 = vector.multi_reduction <add>, %361, %cst_95 [0] : vector<5x2xf32> to vector<2xf32>
      %363 = vector.shape_cast %362 : vector<2xf32> to vector<1x2xf32>
      %364 = math.log %363 : vector<1x2xf32>
      %365 = arith.addf %358, %364 : vector<1x2xf32>
      %366 = arith.subf %350, %365 : vector<1x2xf32>
      %367 = vector.shape_cast %366 : vector<1x2xf32> to vector<1x1x2xf32>
      %c0_96 = arith.constant 0 : index
      %c0_97 = arith.constant 0 : index
      %c0_98 = arith.constant 0 : index
      %368 = vector.load %arg5[%c0_96, %c0_97, %c0_98] : memref<1x1x2xf32, #tpu.memory_space<vmem>>, vector<1x1x2xf32>
      tpu.vector_store %arg5[%c0_96, %c0_97, %c0_98], %367 {strides = array<i32>} : memref<1x1x2xf32, #tpu.memory_space<vmem>>, vector<1x1x2xf32>,
    } else {
    }
    return
  }
  func.func @transform_0(%arg0: i32, %arg1: i32) -> (i32, i32, i32) {
    %c0_i32 = arith.constant 0 : i32
    %c0_i32_0 = arith.constant 0 : i32
    return %arg1, %c0_i32, %arg0 : i32, i32, i32
  }
  func.func @transform_1(%arg0: i32, %arg1: i32) -> (i32, i32, i32) {
    %c0_i32 = arith.constant 0 : i32
    %c0_i32_0 = arith.constant 0 : i32
    return %arg1, %c0_i32, %arg0 : i32, i32, i32
  }
  func.func @transform_2(%arg0: i32, %arg1: i32) -> (i32, i32, i32) {
    %c0_i32 = arith.constant 0 : i32
    %c0_i32_0 = arith.constant 0 : i32
    %c0_i32_1 = arith.constant 0 : i32
    %c0_i32_2 = arith.constant 0 : i32
    return %c0_i32, %c0_i32_0, %c0_i32_1 : i32, i32, i32
  }
  func.func @transform_3(%arg0: i32, %arg1: i32) -> (i32, i32, i32) {
    %c0_i32 = arith.constant 0 : i32
    %c0_i32_0 = arith.constant 0 : i32
    %c0_i32_1 = arith.constant 0 : i32
    return %arg0, %c0_i32, %c0_i32_0 : i32, i32, i32
  }
}

</mosaic_0001>

<llo_original>
// kernel: tpu_custom_call.1
$region0: #{tpu_custom_call.1}
  #allocation0 [shape = 'u32[]', space=smem, size = 0x4, offset = 0x4, fixed_abs, tag = 'smem constant byte address 0x4 - core index']
  #allocation1 [shape = 'u32[144,128]{1,0:T(1,128)}', space=vmem, size = 0x12000, scoped, tag = 'internal scratch']
  #allocation2 [shape = 'f32[5,2]{1,0:T(8,128)}', space=vmem, size = 0x1000, scoped, tag = 'scratch operand']
  #allocation3 [shape = 'f32[1,2]{1,0:T(1,128)}', space=vmem, size = 0x200, scoped, tag = 'scratch operand']
  #allocation4 [shape = 'f32[5,2]{1,0:T(8,128)}', space=vmem, size = 0x1000, scoped, tag = 'scratch operand']
  %s0 = inlined_call_operand.vmem [shape: f32[8,5,2], index: 0, kind: input, shape index: {}]
  %s1 = inlined_call_operand.vmem [shape: s32[1,8,2], index: 1, kind: input, shape index: {}]
  %s2 = inlined_call_operand.vmem [shape: f32[5,5,2], index: 2, kind: input, shape index: {}]
  %s3 = inlined_call_operand.hbm [shape: f32[1,1,2], index: 3, kind: output, shape index: {}]
  %s4 = sld [smem:[#allocation0]]
  $region30: #{tpu_custom_call.1} parent=0
    _
  %s6 = ssub.s32 1, %s4
  %s7 = scalar_select 0, %s6, %s4
  $region1: #{tpu_custom_call.1} parent=0
    #allocation5 [shape = 'u8[512]{0}', space=vmem, size = 0x400, scoped, tag = 'output window, operand 0, single buffered']
    #allocation6 [shape = 's32[1]{0}', space=sflag, size = 0x4, scoped, tag = 'scoped memory for tpu_custom_call.1']
    %8 = vsyncpa [#allocation6], 0
    // Predicated region
    $region2: #{tpu_custom_call.1} parent=1 // pred_check
      _
    $region3: #{tpu_custom_call.1} parent=1 // pred_check_branch
      %10 = sbr.rel (0) target = $region5
    $region4: #{tpu_custom_call.1} parent=1 // pred_region
      _
    $region5: #{tpu_custom_call.1} parent=1 // pred_fallthru
      _
    // Predicated region
    $region6: #{tpu_custom_call.1} parent=1 // pred_check
      _
    $region7: #{tpu_custom_call.1} parent=1 // pred_check_branch
      %12 = sbr.rel (0) target = $region9
    $region8: #{tpu_custom_call.1} parent=1 // pred_region
      _
    $region9: #{tpu_custom_call.1} parent=1 // pred_fallthru
      _
    // Predicated region
    $region10: #{tpu_custom_call.1} parent=1 // pred_check
      _
    $region11: #{tpu_custom_call.1} parent=1 // pred_check_branch
      %14 = sbr.rel (0) target = $region13
    $region12: #{tpu_custom_call.1} parent=1 // pred_region
      _
    $region13: #{tpu_custom_call.1} parent=1 // pred_fallthru
      _
    %p15 = scmp.eq.s32.totalorder 0, 0
    // Predicated region
    $region14: #{tpu_custom_call.1} parent=1 // pred_check
      %p16 = pneg %p15
    $region15: #{tpu_custom_call.1} parent=1 // pred_check_branch
      %18 = sbr.rel (%p16) target = $region17
    $region16: #{tpu_custom_call.1} parent=1 // pred_region
      %vm19 = vcmask 12288
      %20 = vst.msk [vmem:[#allocation2] sm:$0x1f] %vm19, 0.0
      %vm21 = vcmask 8192
      %22 = vst.msk [vmem:[#allocation3] sm:$0x1] %vm21, 0.0
      %23 = vst.msk [vmem:[#allocation4] sm:$0x1f] %vm19, 0.0
    $region17: #{tpu_custom_call.1} parent=1 // pred_fallthru
      _
    %v24 = vlaneseq
    %v25 = vshrl.u32 %v24, 7
    %v26 = vld [vmem:[%s2] sm:$0x1f]
    %v27 = vld [vmem:[%s2 + $0x8] sm:$0x1f]
    %v28 = vld [vmem:[%s2 + $0x10] sm:$0x1f]
    %v29 = vld [vmem:[%s2 + $0x18] sm:$0x1f]
    %v30 = vld [vmem:[%s2 + $0x20] sm:$0x1f]
    %v31 = vld [vmem:[#allocation2] sm:$0x1f]
    %v32 = vld [vmem:[#allocation3] sm:$0x1]
    %v33 = vld [vmem:[#allocation4] sm:$0x1f]
    %v34 = vld [vmem:[%s1] sm:$0xff]
    %v35 = vld [vmem:[%s0] sm:$0x1f]
    %vm36 = vcmp.ge.s32.totalorder %v34, 0
    %v37 = vsel %vm36, 1, 0
    %v38 = vcvt.s32.f32 %v37
    %v39 = vlaneseq
    %v40 = vshrl.u32 %v39, 7
    %v41 = vsub.s32 0, %v40
    %v42 = vrot.slane %v34, %v41
    %vm43 = vcmp.eq.s32.totalorder %v25, %v42
    %v44 = vsel %vm43, 1, 0
    %v45 = vcvt.s32.f32 %v44
    %v47 = vcombine.high %v31, %v31
    %v49 = vunpack.c.l.s4 1966171168
    %v50 = vunpack.c.0.s8 %v49
    %v51 = vlaneseq
    %v52 = vshrl.u32 %v51, 7
    %v53 = vsub.s32 %v50, %v52
    %v54 = vrot.slane %v31, %v53
    %v56 = vunpack.c.l.s4 1966171168
    %v57 = vunpack.c.0.s8 %v56
    %v58 = vlaneseq
    %v59 = vshrl.u32 %v58, 7
    %v60 = vsub.s32 %v57, %v59
    %v61 = vrot.slane %v47, %v60
    %v62 = vcombine.high %v54, %v54
    %v64 = vunpack.c.l.s4 1966171168
    %v65 = vunpack.c.0.s8 %v64
    %v66 = vlaneseq
    %v67 = vshrl.u32 %v66, 7
    %v68 = vsub.s32 %v65, %v67
    %v69 = vrot.slane %v54, %v68
    %v71 = vunpack.c.l.s4 1966171168
    %v72 = vunpack.c.0.s8 %v71
    %v73 = vlaneseq
    %v74 = vshrl.u32 %v73, 7
    %v75 = vsub.s32 %v72, %v74
    %v76 = vrot.slane %v61, %v75
    %v78 = vunpack.c.l.s4 1966171168
    %v79 = vunpack.c.0.s8 %v78
    %v80 = vlaneseq
    %v81 = vshrl.u32 %v80, 7
    %v82 = vsub.s32 %v79, %v81
    %v83 = vrot.slane %v62, %v82
    %v84 = vcombine.high %v69, %v69
    %v85 = vcombine.high %v83, %v83
    %v86 = vlaneseq
    %v87 = vshrl.u32 %v86, 7
    %v88 = vsub.s32 0, %v87
    %v89 = vrot.slane %v69, %v88
    %v90 = vlaneseq
    %v91 = vshrl.u32 %v90, 7
    %v92 = vsub.s32 0, %v91
    %v93 = vrot.slane %v83, %v92
    %v94 = vlaneseq
    %v95 = vshrl.u32 %v94, 7
    %v96 = vsub.s32 0, %v95
    %v97 = vrot.slane %v84, %v96
    %v98 = vlaneseq
    %v99 = vshrl.u32 %v98, 7
    %v100 = vsub.s32 0, %v99
    %v101 = vrot.slane %v85, %v100
    %v102 = vlaneseq
    %v103 = vshrl.u32 %v102, 7
    %v104 = vsub.s32 0, %v103
    %v105 = vrot.slane %v76, %v104
    %v111 = vadd.f32 %v89, %v26
    %v112 = vadd.f32 %v93, %v27
    %v113 = vadd.f32 %v97, %v28
    %v114 = vadd.f32 %v101, %v29
    %v115 = vadd.f32 %v105, %v30
    %vm116 = vcmask 12288
    %v117 = vsel %vm116, %v111, -inf
    %v118 = vsel %vm116, %v112, -inf
    %v119 = vsel %vm116, %v113, -inf
    %v120 = vsel %vm116, %v114, -inf
    %v121 = vsel %vm116, %v115, -inf
    %v122 = vmax.f32 %v117, %v121
    %v123 = vmax.f32 %v122, %v118
    %v124 = vmax.f32 %v119, %v120
    %v125 = vmax.f32 %v123, %v124
    %v126 = vadd.f32 %v35, %v125
    %v127 = vsub.f32 %v111, %v125
    %v128 = vsub.f32 %v112, %v125
    %v129 = vsub.f32 %v113, %v125
    %v130 = vsub.f32 %v114, %v125
    %v131 = vsub.f32 %v115, %v125
    %v132 = vmul.f32 %v127, 1.442695
    %v133 = vpow.pop %v132
    %v134 = vmul.f32 %v128, 1.442695
    %v135 = vpow.pop %v134
    %v136 = vmul.f32 %v129, 1.442695
    %v137 = vpow.pop %v136
    %v138 = vmul.f32 %v130, 1.442695
    %v139 = vpow.pop %v138
    %v140 = vmul.f32 %v131, 1.442695
    %v141 = vpow.pop %v140
    %v142 = vsel %vm116, %v133, 0.0
    %v143 = vsel %vm116, %v135, 0.0
    %v144 = vadd.f32 %v142, %v143
    %v145 = vsel %vm116, %v137, 0.0
    %v146 = vadd.f32 %v144, %v145
    %v147 = vsel %vm116, %v139, 0.0
    %v148 = vadd.f32 %v146, %v147
    %v149 = vsel %vm116, %v141, 0.0
    %v150 = vadd.f32 %v148, %v149
    %v151 = vlog2.pop %v150
    %v152 = vmul.f32 %v151, 0.6931472
    %v153 = vadd.f32 %v126, %v152
    %v154 = vlaneseq
    %v155 = vshrl.u32 %v154, 7
    %v156 = vsub.s32 0, %v155
    %v157 = vrot.slane %v37, %v156
    %vm158 = vcmp.eq.s32.totalorder %v157, 1
    %v159 = vsel %vm158, %v153, %v31
    %s160 = scalar_select %p15, 1, 0
    %v161 = vstv %s160
    %vm162 = vcmp.eq.s32.totalorder %v161, 1
    %v163 = vsel %vm162, %v35, %v159
    %v164 = vmul.f32 %v35, %v45
    %v165 = vsel %vm116, %v164, 0.0
    %v166 = vrot.slane %v165, 4
    %v167 = vadd.f32 %v165, %v166
    %v168 = vrot.slane %v167, 2
    %v169 = vadd.f32 %v167, %v168
    %v170 = vrot.slane %v169, 1
    %v171 = vadd.f32 %v169, %v170
    %v173 = vcombine.high %v33, %v33
    %v175 = vunpack.c.l.s4 1966171168
    %v176 = vunpack.c.0.s8 %v175
    %v177 = vlaneseq
    %v178 = vshrl.u32 %v177, 7
    %v179 = vsub.s32 %v176, %v178
    %v180 = vrot.slane %v33, %v179
    %v182 = vunpack.c.l.s4 1966171168
    %v183 = vunpack.c.0.s8 %v182
    %v184 = vlaneseq
    %v185 = vshrl.u32 %v184, 7
    %v186 = vsub.s32 %v183, %v185
    %v187 = vrot.slane %v173, %v186
    %v188 = vcombine.high %v180, %v180
    %v190 = vunpack.c.l.s4 1966171168
    %v191 = vunpack.c.0.s8 %v190
    %v192 = vlaneseq
    %v193 = vshrl.u32 %v192, 7
    %v194 = vsub.s32 %v191, %v193
    %v195 = vrot.slane %v180, %v194
    %v197 = vunpack.c.l.s4 1966171168
    %v198 = vunpack.c.0.s8 %v197
    %v199 = vlaneseq
    %v200 = vshrl.u32 %v199, 7
    %v201 = vsub.s32 %v198, %v200
    %v202 = vrot.slane %v187, %v201
    %v204 = vunpack.c.l.s4 1966171168
    %v205 = vunpack.c.0.s8 %v204
    %v206 = vlaneseq
    %v207 = vshrl.u32 %v206, 7
    %v208 = vsub.s32 %v205, %v207
    %v209 = vrot.slane %v188, %v208
    %v210 = vcombine.high %v195, %v195
    %v211 = vcombine.high %v209, %v209
    %v212 = vlaneseq
    %v213 = vshrl.u32 %v212, 7
    %v214 = vsub.s32 0, %v213
    %v215 = vrot.slane %v195, %v214
    %v216 = vlaneseq
    %v217 = vshrl.u32 %v216, 7
    %v218 = vsub.s32 0, %v217
    %v219 = vrot.slane %v209, %v218
    %v220 = vlaneseq
    %v221 = vshrl.u32 %v220, 7
    %v222 = vsub.s32 0, %v221
    %v223 = vrot.slane %v210, %v222
    %v224 = vlaneseq
    %v225 = vshrl.u32 %v224, 7
    %v226 = vsub.s32 0, %v225
    %v227 = vrot.slane %v211, %v226
    %v228 = vlaneseq
    %v229 = vshrl.u32 %v228, 7
    %v230 = vsub.s32 0, %v229
    %v231 = vrot.slane %v202, %v230
    %v237 = vmul.f32 %v26, %v215
    %v238 = vmul.f32 %v27, %v219
    %v239 = vmul.f32 %v28, %v223
    %v240 = vmul.f32 %v29, %v227
    %v241 = vmul.f32 %v30, %v231
    %v242 = vsel %vm116, %v237, 0.0
    %v243 = vsel %vm116, %v238, 0.0
    %v244 = vadd.f32 %v242, %v243
    %v245 = vsel %vm116, %v239, 0.0
    %v246 = vadd.f32 %v244, %v245
    %v247 = vsel %vm116, %v240, 0.0
    %v248 = vadd.f32 %v246, %v247
    %v249 = vsel %vm116, %v241, 0.0
    %v250 = vadd.f32 %v248, %v249
    %v251 = vmul.f32 %v250, %v45
    %v252 = vsel %vm116, %v251, 0.0
    %v253 = vrot.slane %v252, 4
    %v254 = vadd.f32 %v252, %v253
    %v255 = vrot.slane %v254, 2
    %v256 = vadd.f32 %v254, %v255
    %v257 = vrot.slane %v256, 1
    %v258 = vadd.f32 %v256, %v257
    %v259 = vadd.f32 %v171, %v258
    %v260 = vmul.f32 %v259, %v38
    %v261 = vadd.f32 %v32, %v260
    %s262 = scalar_lea.vmem %s0, 8
    %v263 = vld [vmem:[%s262] sm:$0x1f]
    %v264 = vlaneseq
    %v265 = vshrl.u32 %v264, 7
    %v266 = vsub.s32 1, %v265
    %v267 = vrot.slane %v34, %v266
    %vm268 = vcmp.eq.s32.totalorder %v25, %v267
    %v269 = vsel %vm268, 1, 0
    %v270 = vcvt.s32.f32 %v269
    %v272 = vcombine.high %v163, %v163
    %v274 = vunpack.c.l.s4 1966171168
    %v275 = vunpack.c.0.s8 %v274
    %v276 = vlaneseq
    %v277 = vshrl.u32 %v276, 7
    %v278 = vsub.s32 %v275, %v277
    %v279 = vrot.slane %v163, %v278
    %v281 = vunpack.c.l.s4 1966171168
    %v282 = vunpack.c.0.s8 %v281
    %v283 = vlaneseq
    %v284 = vshrl.u32 %v283, 7
    %v285 = vsub.s32 %v282, %v284
    %v286 = vrot.slane %v272, %v285
    %v287 = vcombine.high %v279, %v279
    %v289 = vunpack.c.l.s4 1966171168
    %v290 = vunpack.c.0.s8 %v289
    %v291 = vlaneseq
    %v292 = vshrl.u32 %v291, 7
    %v293 = vsub.s32 %v290, %v292
    %v294 = vrot.slane %v279, %v293
    %v296 = vunpack.c.l.s4 1966171168
    %v297 = vunpack.c.0.s8 %v296
    %v298 = vlaneseq
    %v299 = vshrl.u32 %v298, 7
    %v300 = vsub.s32 %v297, %v299
    %v301 = vrot.slane %v286, %v300
    %v303 = vunpack.c.l.s4 1966171168
    %v304 = vunpack.c.0.s8 %v303
    %v305 = vlaneseq
    %v306 = vshrl.u32 %v305, 7
    %v307 = vsub.s32 %v304, %v306
    %v308 = vrot.slane %v287, %v307
    %v309 = vcombine.high %v294, %v294
    %v310 = vcombine.high %v308, %v308
    %v311 = vlaneseq
    %v312 = vshrl.u32 %v311, 7
    %v313 = vsub.s32 0, %v312
    %v314 = vrot.slane %v294, %v313
    %v315 = vlaneseq
    %v316 = vshrl.u32 %v315, 7
    %v317 = vsub.s32 0, %v316
    %v318 = vrot.slane %v308, %v317
    %v319 = vlaneseq
    %v320 = vshrl.u32 %v319, 7
    %v321 = vsub.s32 0, %v320
    %v322 = vrot.slane %v309, %v321
    %v323 = vlaneseq
    %v324 = vshrl.u32 %v323, 7
    %v325 = vsub.s32 0, %v324
    %v326 = vrot.slane %v310, %v325
    %v327 = vlaneseq
    %v328 = vshrl.u32 %v327, 7
    %v329 = vsub.s32 0, %v328
    %v330 = vrot.slane %v301, %v329
    %v336 = vadd.f32 %v314, %v26
    %v337 = vadd.f32 %v318, %v27
    %v338 = vadd.f32 %v322, %v28
    %v339 = vadd.f32 %v326, %v29
    %v340 = vadd.f32 %v330, %v30
    %v341 = vsel %vm116, %v336, -inf
    %v342 = vsel %vm116, %v337, -inf
    %v343 = vsel %vm116, %v338, -inf
    %v344 = vsel %vm116, %v339, -inf
    %v345 = vsel %vm116, %v340, -inf
    %v346 = vmax.f32 %v341, %v345
    %v347 = vmax.f32 %v346, %v342
    %v348 = vmax.f32 %v343, %v344
    %v349 = vmax.f32 %v347, %v348
    %v350 = vadd.f32 %v263, %v349
    %v351 = vsub.f32 %v336, %v349
    %v352 = vsub.f32 %v337, %v349
    %v353 = vsub.f32 %v338, %v349
    %v354 = vsub.f32 %v339, %v349
    %v355 = vsub.f32 %v340, %v349
    %v356 = vmul.f32 %v351, 1.442695
    %v357 = vpow.pop %v356
    %v358 = vmul.f32 %v352, 1.442695
    %v359 = vpow.pop %v358
    %v360 = vmul.f32 %v353, 1.442695
    %v361 = vpow.pop %v360
    %v362 = vmul.f32 %v354, 1.442695
    %v363 = vpow.pop %v362
    %v364 = vmul.f32 %v355, 1.442695
    %v365 = vpow.pop %v364
    %v366 = vsel %vm116, %v357, 0.0
    %v367 = vsel %vm116, %v359, 0.0
    %v368 = vadd.f32 %v366, %v367
    %v369 = vsel %vm116, %v361, 0.0
    %v370 = vadd.f32 %v368, %v369
    %v371 = vsel %vm116, %v363, 0.0
    %v372 = vadd.f32 %v370, %v371
    %v373 = vsel %vm116, %v365, 0.0
    %v374 = vadd.f32 %v372, %v373
    %v375 = vlog2.pop %v374
    %v376 = vmul.f32 %v375, 0.6931472
    %v377 = vadd.f32 %v350, %v376
    %v378 = vlaneseq
    %v379 = vshrl.u32 %v378, 7
    %v380 = vsub.s32 1, %v379
    %v381 = vrot.slane %v37, %v380
    %vm382 = vcmp.eq.s32.totalorder %v381, 1
    %v383 = vsel %vm382, %v377, %v163
    %v384 = vmul.f32 %v263, %v270
    %v385 = vsel %vm116, %v384, 0.0
    %v386 = vrot.slane %v385, 4
    %v387 = vadd.f32 %v385, %v386
    %v388 = vrot.slane %v387, 2
    %v389 = vadd.f32 %v387, %v388
    %v390 = vrot.slane %v389, 1
    %v391 = vadd.f32 %v389, %v390
    %v393 = vcombine.high %v45, %v45
    %v395 = vunpack.c.l.s4 1966171168
    %v396 = vunpack.c.0.s8 %v395
    %v397 = vlaneseq
    %v398 = vshrl.u32 %v397, 7
    %v399 = vsub.s32 %v396, %v398
    %v400 = vrot.slane %v45, %v399
    %v402 = vunpack.c.l.s4 1966171168
    %v403 = vunpack.c.0.s8 %v402
    %v404 = vlaneseq
    %v405 = vshrl.u32 %v404, 7
    %v406 = vsub.s32 %v403, %v405
    %v407 = vrot.slane %v393, %v406
    %v408 = vcombine.high %v400, %v400
    %v410 = vunpack.c.l.s4 1966171168
    %v411 = vunpack.c.0.s8 %v410
    %v412 = vlaneseq
    %v413 = vshrl.u32 %v412, 7
    %v414 = vsub.s32 %v411, %v413
    %v415 = vrot.slane %v400, %v414
    %v417 = vunpack.c.l.s4 1966171168
    %v418 = vunpack.c.0.s8 %v417
    %v419 = vlaneseq
    %v420 = vshrl.u32 %v419, 7
    %v421 = vsub.s32 %v418, %v420
    %v422 = vrot.slane %v407, %v421
    %v424 = vunpack.c.l.s4 1966171168
    %v425 = vunpack.c.0.s8 %v424
    %v426 = vlaneseq
    %v427 = vshrl.u32 %v426, 7
    %v428 = vsub.s32 %v425, %v427
    %v429 = vrot.slane %v408, %v428
    %v430 = vcombine.high %v415, %v415
    %v431 = vcombine.high %v429, %v429
    %v432 = vlaneseq
    %v433 = vshrl.u32 %v432, 7
    %v434 = vsub.s32 0, %v433
    %v435 = vrot.slane %v415, %v434
    %v436 = vlaneseq
    %v437 = vshrl.u32 %v436, 7
    %v438 = vsub.s32 0, %v437
    %v439 = vrot.slane %v429, %v438
    %v440 = vlaneseq
    %v441 = vshrl.u32 %v440, 7
    %v442 = vsub.s32 0, %v441
    %v443 = vrot.slane %v430, %v442
    %v444 = vlaneseq
    %v445 = vshrl.u32 %v444, 7
    %v446 = vsub.s32 0, %v445
    %v447 = vrot.slane %v431, %v446
    %v448 = vlaneseq
    %v449 = vshrl.u32 %v448, 7
    %v450 = vsub.s32 0, %v449
    %v451 = vrot.slane %v422, %v450
    %v457 = vmul.f32 %v26, %v435
    %v458 = vmul.f32 %v27, %v439
    %v459 = vmul.f32 %v28, %v443
    %v460 = vmul.f32 %v29, %v447
    %v461 = vmul.f32 %v30, %v451
    %v462 = vsel %vm116, %v457, 0.0
    %v463 = vsel %vm116, %v458, 0.0
    %v464 = vadd.f32 %v462, %v463
    %v465 = vsel %vm116, %v459, 0.0
    %v466 = vadd.f32 %v464, %v465
    %v467 = vsel %vm116, %v460, 0.0
    %v468 = vadd.f32 %v466, %v467
    %v469 = vsel %vm116, %v461, 0.0
    %v470 = vadd.f32 %v468, %v469
    %v471 = vmul.f32 %v470, %v270
    %v472 = vsel %vm116, %v471, 0.0
    %v473 = vrot.slane %v472, 4
    %v474 = vadd.f32 %v472, %v473
    %v475 = vrot.slane %v474, 2
    %v476 = vadd.f32 %v474, %v475
    %v477 = vrot.slane %v476, 1
    %v478 = vadd.f32 %v476, %v477
    %v479 = vadd.f32 %v391, %v478
    %v480 = vmul.f32 %v479, %v38
    %v483 = vunpack.c.l.s4 1966171168
    %v484 = vunpack.c.0.s8 %v483
    %v485 = vlaneseq
    %v486 = vshrl.u32 %v485, 7
    %v487 = vsub.s32 %v484, %v486
    %v488 = vrot.slane %v480, %v487
    %v489 = vcombine.high %v488, %v488
    %v491 = vunpack.c.l.s4 1966171168
    %v492 = vunpack.c.0.s8 %v491
    %v493 = vlaneseq
    %v494 = vshrl.u32 %v493, 7
    %v495 = vsub.s32 %v492, %v494
    %v496 = vrot.slane %v489, %v495
    %v498 = vadd.f32 %v261, %v496
    %s499 = scalar_lea.vmem %s0, 16
    %v500 = vld [vmem:[%s499] sm:$0x1f]
    %v501 = vlaneseq
    %v502 = vshrl.u32 %v501, 7
    %v503 = vsub.s32 2, %v502
    %v504 = vrot.slane %v34, %v503
    %vm505 = vcmp.eq.s32.totalorder %v25, %v504
    %v506 = vsel %vm505, 1, 0
    %v507 = vcvt.s32.f32 %v506
    %v509 = vcombine.high %v383, %v383
    %v511 = vunpack.c.l.s4 1966171168
    %v512 = vunpack.c.0.s8 %v511
    %v513 = vlaneseq
    %v514 = vshrl.u32 %v513, 7
    %v515 = vsub.s32 %v512, %v514
    %v516 = vrot.slane %v383, %v515
    %v518 = vunpack.c.l.s4 1966171168
    %v519 = vunpack.c.0.s8 %v518
    %v520 = vlaneseq
    %v521 = vshrl.u32 %v520, 7
    %v522 = vsub.s32 %v519, %v521
    %v523 = vrot.slane %v509, %v522
    %v524 = vcombine.high %v516, %v516
    %v526 = vunpack.c.l.s4 1966171168
    %v527 = vunpack.c.0.s8 %v526
    %v528 = vlaneseq
    %v529 = vshrl.u32 %v528, 7
    %v530 = vsub.s32 %v527, %v529
    %v531 = vrot.slane %v516, %v530
    %v533 = vunpack.c.l.s4 1966171168
    %v534 = vunpack.c.0.s8 %v533
    %v535 = vlaneseq
    %v536 = vshrl.u32 %v535, 7
    %v537 = vsub.s32 %v534, %v536
    %v538 = vrot.slane %v523, %v537
    %v540 = vunpack.c.l.s4 1966171168
    %v541 = vunpack.c.0.s8 %v540
    %v542 = vlaneseq
    %v543 = vshrl.u32 %v542, 7
    %v544 = vsub.s32 %v541, %v543
    %v545 = vrot.slane %v524, %v544
    %v546 = vcombine.high %v531, %v531
    %v547 = vcombine.high %v545, %v545
    %v548 = vlaneseq
    %v549 = vshrl.u32 %v548, 7
    %v550 = vsub.s32 0, %v549
    %v551 = vrot.slane %v531, %v550
    %v552 = vlaneseq
    %v553 = vshrl.u32 %v552, 7
    %v554 = vsub.s32 0, %v553
    %v555 = vrot.slane %v545, %v554
    %v556 = vlaneseq
    %v557 = vshrl.u32 %v556, 7
    %v558 = vsub.s32 0, %v557
    %v559 = vrot.slane %v546, %v558
    %v560 = vlaneseq
    %v561 = vshrl.u32 %v560, 7
    %v562 = vsub.s32 0, %v561
    %v563 = vrot.slane %v547, %v562
    %v564 = vlaneseq
    %v565 = vshrl.u32 %v564, 7
    %v566 = vsub.s32 0, %v565
    %v567 = vrot.slane %v538, %v566
    %v573 = vadd.f32 %v551, %v26
    %v574 = vadd.f32 %v555, %v27
    %v575 = vadd.f32 %v559, %v28
    %v576 = vadd.f32 %v563, %v29
    %v577 = vadd.f32 %v567, %v30
    %v578 = vsel %vm116, %v573, -inf
    %v579 = vsel %vm116, %v574, -inf
    %v580 = vsel %vm116, %v575, -inf
    %v581 = vsel %vm116, %v576, -inf
    %v582 = vsel %vm116, %v577, -inf
    %v583 = vmax.f32 %v578, %v582
    %v584 = vmax.f32 %v583, %v579
    %v585 = vmax.f32 %v580, %v581
    %v586 = vmax.f32 %v584, %v585
    %v587 = vadd.f32 %v500, %v586
    %v588 = vsub.f32 %v573, %v586
    %v589 = vsub.f32 %v574, %v586
    %v590 = vsub.f32 %v575, %v586
    %v591 = vsub.f32 %v576, %v586
    %v592 = vsub.f32 %v577, %v586
    %v593 = vmul.f32 %v588, 1.442695
    %v594 = vpow.pop %v593
    %v595 = vmul.f32 %v589, 1.442695
    %v596 = vpow.pop %v595
    %v597 = vmul.f32 %v590, 1.442695
    %v598 = vpow.pop %v597
    %v599 = vmul.f32 %v591, 1.442695
    %v600 = vpow.pop %v599
    %v601 = vmul.f32 %v592, 1.442695
    %v602 = vpow.pop %v601
    %v603 = vsel %vm116, %v594, 0.0
    %v604 = vsel %vm116, %v596, 0.0
    %v605 = vadd.f32 %v603, %v604
    %v606 = vsel %vm116, %v598, 0.0
    %v607 = vadd.f32 %v605, %v606
    %v608 = vsel %vm116, %v600, 0.0
    %v609 = vadd.f32 %v607, %v608
    %v610 = vsel %vm116, %v602, 0.0
    %v611 = vadd.f32 %v609, %v610
    %v612 = vlog2.pop %v611
    %v613 = vmul.f32 %v612, 0.6931472
    %v614 = vadd.f32 %v587, %v613
    %v615 = vlaneseq
    %v616 = vshrl.u32 %v615, 7
    %v617 = vsub.s32 2, %v616
    %v618 = vrot.slane %v37, %v617
    %vm619 = vcmp.eq.s32.totalorder %v618, 1
    %v620 = vsel %vm619, %v614, %v383
    %v621 = vmul.f32 %v500, %v507
    %v622 = vsel %vm116, %v621, 0.0
    %v623 = vrot.slane %v622, 4
    %v624 = vadd.f32 %v622, %v623
    %v625 = vrot.slane %v624, 2
    %v626 = vadd.f32 %v624, %v625
    %v627 = vrot.slane %v626, 1
    %v628 = vadd.f32 %v626, %v627
    %v630 = vcombine.high %v270, %v270
    %v632 = vunpack.c.l.s4 1966171168
    %v633 = vunpack.c.0.s8 %v632
    %v634 = vlaneseq
    %v635 = vshrl.u32 %v634, 7
    %v636 = vsub.s32 %v633, %v635
    %v637 = vrot.slane %v270, %v636
    %v639 = vunpack.c.l.s4 1966171168
    %v640 = vunpack.c.0.s8 %v639
    %v641 = vlaneseq
    %v642 = vshrl.u32 %v641, 7
    %v643 = vsub.s32 %v640, %v642
    %v644 = vrot.slane %v630, %v643
    %v645 = vcombine.high %v637, %v637
    %v647 = vunpack.c.l.s4 1966171168
    %v648 = vunpack.c.0.s8 %v647
    %v649 = vlaneseq
    %v650 = vshrl.u32 %v649, 7
    %v651 = vsub.s32 %v648, %v650
    %v652 = vrot.slane %v637, %v651
    %v654 = vunpack.c.l.s4 1966171168
    %v655 = vunpack.c.0.s8 %v654
    %v656 = vlaneseq
    %v657 = vshrl.u32 %v656, 7
    %v658 = vsub.s32 %v655, %v657
    %v659 = vrot.slane %v644, %v658
    %v661 = vunpack.c.l.s4 1966171168
    %v662 = vunpack.c.0.s8 %v661
    %v663 = vlaneseq
    %v664 = vshrl.u32 %v663, 7
    %v665 = vsub.s32 %v662, %v664
    %v666 = vrot.slane %v645, %v665
    %v667 = vcombine.high %v652, %v652
    %v668 = vcombine.high %v666, %v666
    %v669 = vlaneseq
    %v670 = vshrl.u32 %v669, 7
    %v671 = vsub.s32 0, %v670
    %v672 = vrot.slane %v652, %v671
    %v673 = vlaneseq
    %v674 = vshrl.u32 %v673, 7
    %v675 = vsub.s32 0, %v674
    %v676 = vrot.slane %v666, %v675
    %v677 = vlaneseq
    %v678 = vshrl.u32 %v677, 7
    %v679 = vsub.s32 0, %v678
    %v680 = vrot.slane %v667, %v679
    %v681 = vlaneseq
    %v682 = vshrl.u32 %v681, 7
    %v683 = vsub.s32 0, %v682
    %v684 = vrot.slane %v668, %v683
    %v685 = vlaneseq
    %v686 = vshrl.u32 %v685, 7
    %v687 = vsub.s32 0, %v686
    %v688 = vrot.slane %v659, %v687
    %v694 = vmul.f32 %v26, %v672
    %v695 = vmul.f32 %v27, %v676
    %v696 = vmul.f32 %v28, %v680
    %v697 = vmul.f32 %v29, %v684
    %v698 = vmul.f32 %v30, %v688
    %v699 = vsel %vm116, %v694, 0.0
    %v700 = vsel %vm116, %v695, 0.0
    %v701 = vadd.f32 %v699, %v700
    %v702 = vsel %vm116, %v696, 0.0
    %v703 = vadd.f32 %v701, %v702
    %v704 = vsel %vm116, %v697, 0.0
    %v705 = vadd.f32 %v703, %v704
    %v706 = vsel %vm116, %v698, 0.0
    %v707 = vadd.f32 %v705, %v706
    %v708 = vmul.f32 %v707, %v507
    %v709 = vsel %vm116, %v708, 0.0
    %v710 = vrot.slane %v709, 4
    %v711 = vadd.f32 %v709, %v710
    %v712 = vrot.slane %v711, 2
    %v713 = vadd.f32 %v711, %v712
    %v714 = vrot.slane %v713, 1
    %v715 = vadd.f32 %v713, %v714
    %v716 = vadd.f32 %v628, %v715
    %v717 = vmul.f32 %v716, %v38
    %v720 = vunpack.c.l.s4 1966171168
    %v721 = vunpack.c.0.s8 %v720
    %v722 = vlaneseq
    %v723 = vshrl.u32 %v722, 7
    %v724 = vsub.s32 %v721, %v723
    %v725 = vrot.slane %v717, %v724
    %v727 = vunpack.c.l.s4 1966171168
    %v728 = vunpack.c.0.s8 %v727
    %v729 = vlaneseq
    %v730 = vshrl.u32 %v729, 7
    %v731 = vsub.s32 %v728, %v730
    %v732 = vrot.slane %v725, %v731
    %v733 = vcombine.high %v732, %v732
    %v735 = vadd.f32 %v498, %v733
    %s736 = scalar_lea.vmem %s0, 24
    %v737 = vld [vmem:[%s736] sm:$0x1f]
    %v738 = vlaneseq
    %v739 = vshrl.u32 %v738, 7
    %v740 = vsub.s32 3, %v739
    %v741 = vrot.slane %v34, %v740
    %vm742 = vcmp.eq.s32.totalorder %v25, %v741
    %v743 = vsel %vm742, 1, 0
    %v744 = vcvt.s32.f32 %v743
    %v746 = vcombine.high %v620, %v620
    %v748 = vunpack.c.l.s4 1966171168
    %v749 = vunpack.c.0.s8 %v748
    %v750 = vlaneseq
    %v751 = vshrl.u32 %v750, 7
    %v752 = vsub.s32 %v749, %v751
    %v753 = vrot.slane %v620, %v752
    %v755 = vunpack.c.l.s4 1966171168
    %v756 = vunpack.c.0.s8 %v755
    %v757 = vlaneseq
    %v758 = vshrl.u32 %v757, 7
    %v759 = vsub.s32 %v756, %v758
    %v760 = vrot.slane %v746, %v759
    %v761 = vcombine.high %v753, %v753
    %v763 = vunpack.c.l.s4 1966171168
    %v764 = vunpack.c.0.s8 %v763
    %v765 = vlaneseq
    %v766 = vshrl.u32 %v765, 7
    %v767 = vsub.s32 %v764, %v766
    %v768 = vrot.slane %v753, %v767
    %v770 = vunpack.c.l.s4 1966171168
    %v771 = vunpack.c.0.s8 %v770
    %v772 = vlaneseq
    %v773 = vshrl.u32 %v772, 7
    %v774 = vsub.s32 %v771, %v773
    %v775 = vrot.slane %v760, %v774
    %v777 = vunpack.c.l.s4 1966171168
    %v778 = vunpack.c.0.s8 %v777
    %v779 = vlaneseq
    %v780 = vshrl.u32 %v779, 7
    %v781 = vsub.s32 %v778, %v780
    %v782 = vrot.slane %v761, %v781
    %v783 = vcombine.high %v768, %v768
    %v784 = vcombine.high %v782, %v782
    %v785 = vlaneseq
    %v786 = vshrl.u32 %v785, 7
    %v787 = vsub.s32 0, %v786
    %v788 = vrot.slane %v768, %v787
    %v789 = vlaneseq
    %v790 = vshrl.u32 %v789, 7
    %v791 = vsub.s32 0, %v790
    %v792 = vrot.slane %v782, %v791
    %v793 = vlaneseq
    %v794 = vshrl.u32 %v793, 7
    %v795 = vsub.s32 0, %v794
    %v796 = vrot.slane %v783, %v795
    %v797 = vlaneseq
    %v798 = vshrl.u32 %v797, 7
    %v799 = vsub.s32 0, %v798
    %v800 = vrot.slane %v784, %v799
    %v801 = vlaneseq
    %v802 = vshrl.u32 %v801, 7
    %v803 = vsub.s32 0, %v802
    %v804 = vrot.slane %v775, %v803
    %v810 = vadd.f32 %v788, %v26
    %v811 = vadd.f32 %v792, %v27
    %v812 = vadd.f32 %v796, %v28
    %v813 = vadd.f32 %v800, %v29
    %v814 = vadd.f32 %v804, %v30
    %v815 = vsel %vm116, %v810, -inf
    %v816 = vsel %vm116, %v811, -inf
    %v817 = vsel %vm116, %v812, -inf
    %v818 = vsel %vm116, %v813, -inf
    %v819 = vsel %vm116, %v814, -inf
    %v820 = vmax.f32 %v815, %v819
    %v821 = vmax.f32 %v820, %v816
    %v822 = vmax.f32 %v817, %v818
    %v823 = vmax.f32 %v821, %v822
    %v824 = vadd.f32 %v737, %v823
    %v825 = vsub.f32 %v810, %v823
    %v826 = vsub.f32 %v811, %v823
    %v827 = vsub.f32 %v812, %v823
    %v828 = vsub.f32 %v813, %v823
    %v829 = vsub.f32 %v814, %v823
    %v830 = vmul.f32 %v825, 1.442695
    %v831 = vpow.pop %v830
    %v832 = vmul.f32 %v826, 1.442695
    %v833 = vpow.pop %v832
    %v834 = vmul.f32 %v827, 1.442695
    %v835 = vpow.pop %v834
    %v836 = vmul.f32 %v828, 1.442695
    %v837 = vpow.pop %v836
    %v838 = vmul.f32 %v829, 1.442695
    %v839 = vpow.pop %v838
    %v840 = vsel %vm116, %v831, 0.0
    %v841 = vsel %vm116, %v833, 0.0
    %v842 = vadd.f32 %v840, %v841
    %v843 = vsel %vm116, %v835, 0.0
    %v844 = vadd.f32 %v842, %v843
    %v845 = vsel %vm116, %v837, 0.0
    %v846 = vadd.f32 %v844, %v845
    %v847 = vsel %vm116, %v839, 0.0
    %v848 = vadd.f32 %v846, %v847
    %v849 = vlog2.pop %v848
    %v850 = vmul.f32 %v849, 0.6931472
    %v851 = vadd.f32 %v824, %v850
    %v852 = vlaneseq
    %v853 = vshrl.u32 %v852, 7
    %v854 = vsub.s32 3, %v853
    %v855 = vrot.slane %v37, %v854
    %vm856 = vcmp.eq.s32.totalorder %v855, 1
    %v857 = vsel %vm856, %v851, %v620
    %v858 = vmul.f32 %v737, %v744
    %v859 = vsel %vm116, %v858, 0.0
    %v860 = vrot.slane %v859, 4
    %v861 = vadd.f32 %v859, %v860
    %v862 = vrot.slane %v861, 2
    %v863 = vadd.f32 %v861, %v862
    %v864 = vrot.slane %v863, 1
    %v865 = vadd.f32 %v863, %v864
    %v867 = vcombine.high %v507, %v507
    %v869 = vunpack.c.l.s4 1966171168
    %v870 = vunpack.c.0.s8 %v869
    %v871 = vlaneseq
    %v872 = vshrl.u32 %v871, 7
    %v873 = vsub.s32 %v870, %v872
    %v874 = vrot.slane %v507, %v873
    %v876 = vunpack.c.l.s4 1966171168
    %v877 = vunpack.c.0.s8 %v876
    %v878 = vlaneseq
    %v879 = vshrl.u32 %v878, 7
    %v880 = vsub.s32 %v877, %v879
    %v881 = vrot.slane %v867, %v880
    %v882 = vcombine.high %v874, %v874
    %v884 = vunpack.c.l.s4 1966171168
    %v885 = vunpack.c.0.s8 %v884
    %v886 = vlaneseq
    %v887 = vshrl.u32 %v886, 7
    %v888 = vsub.s32 %v885, %v887
    %v889 = vrot.slane %v874, %v888
    %v891 = vunpack.c.l.s4 1966171168
    %v892 = vunpack.c.0.s8 %v891
    %v893 = vlaneseq
    %v894 = vshrl.u32 %v893, 7
    %v895 = vsub.s32 %v892, %v894
    %v896 = vrot.slane %v881, %v895
    %v898 = vunpack.c.l.s4 1966171168
    %v899 = vunpack.c.0.s8 %v898
    %v900 = vlaneseq
    %v901 = vshrl.u32 %v900, 7
    %v902 = vsub.s32 %v899, %v901
    %v903 = vrot.slane %v882, %v902
    %v904 = vcombine.high %v889, %v889
    %v905 = vcombine.high %v903, %v903
    %v906 = vlaneseq
    %v907 = vshrl.u32 %v906, 7
    %v908 = vsub.s32 0, %v907
    %v909 = vrot.slane %v889, %v908
    %v910 = vlaneseq
    %v911 = vshrl.u32 %v910, 7
    %v912 = vsub.s32 0, %v911
    %v913 = vrot.slane %v903, %v912
    %v914 = vlaneseq
    %v915 = vshrl.u32 %v914, 7
    %v916 = vsub.s32 0, %v915
    %v917 = vrot.slane %v904, %v916
    %v918 = vlaneseq
    %v919 = vshrl.u32 %v918, 7
    %v920 = vsub.s32 0, %v919
    %v921 = vrot.slane %v905, %v920
    %v922 = vlaneseq
    %v923 = vshrl.u32 %v922, 7
    %v924 = vsub.s32 0, %v923
    %v925 = vrot.slane %v896, %v924
    %v931 = vmul.f32 %v26, %v909
    %v932 = vmul.f32 %v27, %v913
    %v933 = vmul.f32 %v28, %v917
    %v934 = vmul.f32 %v29, %v921
    %v935 = vmul.f32 %v30, %v925
    %v936 = vsel %vm116, %v931, 0.0
    %v937 = vsel %vm116, %v932, 0.0
    %v938 = vadd.f32 %v936, %v937
    %v939 = vsel %vm116, %v933, 0.0
    %v940 = vadd.f32 %v938, %v939
    %v941 = vsel %vm116, %v934, 0.0
    %v942 = vadd.f32 %v940, %v941
    %v943 = vsel %vm116, %v935, 0.0
    %v944 = vadd.f32 %v942, %v943
    %v945 = vmul.f32 %v944, %v744
    %v946 = vsel %vm116, %v945, 0.0
    %v947 = vrot.slane %v946, 4
    %v948 = vadd.f32 %v946, %v947
    %v949 = vrot.slane %v948, 2
    %v950 = vadd.f32 %v948, %v949
    %v951 = vrot.slane %v950, 1
    %v952 = vadd.f32 %v950, %v951
    %v953 = vadd.f32 %v865, %v952
    %v954 = vmul.f32 %v953, %v38
    %v957 = vunpack.c.l.s4 1966171168
    %v958 = vunpack.c.0.s8 %v957
    %v959 = vlaneseq
    %v960 = vshrl.u32 %v959, 7
    %v961 = vsub.s32 %v958, %v960
    %v962 = vrot.slane %v954, %v961
    %v963 = vcombine.high %v962, %v962
    %v965 = vunpack.c.l.s4 1966171168
    %v966 = vunpack.c.0.s8 %v965
    %v967 = vlaneseq
    %v968 = vshrl.u32 %v967, 7
    %v969 = vsub.s32 %v966, %v968
    %v970 = vrot.slane %v963, %v969
    %v971 = vcombine.high %v970, %v970
    %v973 = vadd.f32 %v735, %v971
    %s974 = scalar_lea.vmem %s0, 32
    %v975 = vld [vmem:[%s974] sm:$0x1f]
    %v976 = vlaneseq
    %v977 = vshrl.u32 %v976, 7
    %v978 = vsub.s32 4, %v977
    %v979 = vrot.slane %v34, %v978
    %vm980 = vcmp.eq.s32.totalorder %v25, %v979
    %v981 = vsel %vm980, 1, 0
    %v982 = vcvt.s32.f32 %v981
    %v984 = vcombine.high %v857, %v857
    %v986 = vunpack.c.l.s4 1966171168
    %v987 = vunpack.c.0.s8 %v986
    %v988 = vlaneseq
    %v989 = vshrl.u32 %v988, 7
    %v990 = vsub.s32 %v987, %v989
    %v991 = vrot.slane %v857, %v990
    %v993 = vunpack.c.l.s4 1966171168
    %v994 = vunpack.c.0.s8 %v993
    %v995 = vlaneseq
    %v996 = vshrl.u32 %v995, 7
    %v997 = vsub.s32 %v994, %v996
    %v998 = vrot.slane %v984, %v997
    %v999 = vcombine.high %v991, %v991
    %v1001 = vunpack.c.l.s4 1966171168
    %v1002 = vunpack.c.0.s8 %v1001
    %v1003 = vlaneseq
    %v1004 = vshrl.u32 %v1003, 7
    %v1005 = vsub.s32 %v1002, %v1004
    %v1006 = vrot.slane %v991, %v1005
    %v1008 = vunpack.c.l.s4 1966171168
    %v1009 = vunpack.c.0.s8 %v1008
    %v1010 = vlaneseq
    %v1011 = vshrl.u32 %v1010, 7
    %v1012 = vsub.s32 %v1009, %v1011
    %v1013 = vrot.slane %v998, %v1012
    %v1015 = vunpack.c.l.s4 1966171168
    %v1016 = vunpack.c.0.s8 %v1015
    %v1017 = vlaneseq
    %v1018 = vshrl.u32 %v1017, 7
    %v1019 = vsub.s32 %v1016, %v1018
    %v1020 = vrot.slane %v999, %v1019
    %v1021 = vcombine.high %v1006, %v1006
    %v1022 = vcombine.high %v1020, %v1020
    %v1023 = vlaneseq
    %v1024 = vshrl.u32 %v1023, 7
    %v1025 = vsub.s32 0, %v1024
    %v1026 = vrot.slane %v1006, %v1025
    %v1027 = vlaneseq
    %v1028 = vshrl.u32 %v1027, 7
    %v1029 = vsub.s32 0, %v1028
    %v1030 = vrot.slane %v1020, %v1029
    %v1031 = vlaneseq
    %v1032 = vshrl.u32 %v1031, 7
    %v1033 = vsub.s32 0, %v1032
    %v1034 = vrot.slane %v1021, %v1033
    %v1035 = vlaneseq
    %v1036 = vshrl.u32 %v1035, 7
    %v1037 = vsub.s32 0, %v1036
    %v1038 = vrot.slane %v1022, %v1037
    %v1039 = vlaneseq
    %v1040 = vshrl.u32 %v1039, 7
    %v1041 = vsub.s32 0, %v1040
    %v1042 = vrot.slane %v1013, %v1041
    %v1048 = vadd.f32 %v1026, %v26
    %v1049 = vadd.f32 %v1030, %v27
    %v1050 = vadd.f32 %v1034, %v28
    %v1051 = vadd.f32 %v1038, %v29
    %v1052 = vadd.f32 %v1042, %v30
    %v1053 = vsel %vm116, %v1048, -inf
    %v1054 = vsel %vm116, %v1049, -inf
    %v1055 = vsel %vm116, %v1050, -inf
    %v1056 = vsel %vm116, %v1051, -inf
    %v1057 = vsel %vm116, %v1052, -inf
    %v1058 = vmax.f32 %v1053, %v1057
    %v1059 = vmax.f32 %v1058, %v1054
    %v1060 = vmax.f32 %v1055, %v1056
    %v1061 = vmax.f32 %v1059, %v1060
    %v1062 = vadd.f32 %v975, %v1061
    %v1063 = vsub.f32 %v1048, %v1061
    %v1064 = vsub.f32 %v1049, %v1061
    %v1065 = vsub.f32 %v1050, %v1061
    %v1066 = vsub.f32 %v1051, %v1061
    %v1067 = vsub.f32 %v1052, %v1061
    %v1068 = vmul.f32 %v1063, 1.442695
    %v1069 = vpow.pop %v1068
    %v1070 = vmul.f32 %v1064, 1.442695
    %v1071 = vpow.pop %v1070
    %v1072 = vmul.f32 %v1065, 1.442695
    %v1073 = vpow.pop %v1072
    %v1074 = vmul.f32 %v1066, 1.442695
    %v1075 = vpow.pop %v1074
    %v1076 = vmul.f32 %v1067, 1.442695
    %v1077 = vpow.pop %v1076
    %v1078 = vsel %vm116, %v1069, 0.0
    %v1079 = vsel %vm116, %v1071, 0.0
    %v1080 = vadd.f32 %v1078, %v1079
    %v1081 = vsel %vm116, %v1073, 0.0
    %v1082 = vadd.f32 %v1080, %v1081
    %v1083 = vsel %vm116, %v1075, 0.0
    %v1084 = vadd.f32 %v1082, %v1083
    %v1085 = vsel %vm116, %v1077, 0.0
    %v1086 = vadd.f32 %v1084, %v1085
    %v1087 = vlog2.pop %v1086
    %v1088 = vmul.f32 %v1087, 0.6931472
    %v1089 = vadd.f32 %v1062, %v1088
    %v1090 = vlaneseq
    %v1091 = vshrl.u32 %v1090, 7
    %v1092 = vsub.s32 4, %v1091
    %v1093 = vrot.slane %v37, %v1092
    %vm1094 = vcmp.eq.s32.totalorder %v1093, 1
    %v1095 = vsel %vm1094, %v1089, %v857
    %v1096 = vmul.f32 %v975, %v982
    %v1097 = vsel %vm116, %v1096, 0.0
    %v1098 = vrot.slane %v1097, 4
    %v1099 = vadd.f32 %v1097, %v1098
    %v1100 = vrot.slane %v1099, 2
    %v1101 = vadd.f32 %v1099, %v1100
    %v1102 = vrot.slane %v1101, 1
    %v1103 = vadd.f32 %v1101, %v1102
    %v1105 = vcombine.high %v744, %v744
    %v1107 = vunpack.c.l.s4 1966171168
    %v1108 = vunpack.c.0.s8 %v1107
    %v1109 = vlaneseq
    %v1110 = vshrl.u32 %v1109, 7
    %v1111 = vsub.s32 %v1108, %v1110
    %v1112 = vrot.slane %v744, %v1111
    %v1114 = vunpack.c.l.s4 1966171168
    %v1115 = vunpack.c.0.s8 %v1114
    %v1116 = vlaneseq
    %v1117 = vshrl.u32 %v1116, 7
    %v1118 = vsub.s32 %v1115, %v1117
    %v1119 = vrot.slane %v1105, %v1118
    %v1120 = vcombine.high %v1112, %v1112
    %v1122 = vunpack.c.l.s4 1966171168
    %v1123 = vunpack.c.0.s8 %v1122
    %v1124 = vlaneseq
    %v1125 = vshrl.u32 %v1124, 7
    %v1126 = vsub.s32 %v1123, %v1125
    %v1127 = vrot.slane %v1112, %v1126
    %v1129 = vunpack.c.l.s4 1966171168
    %v1130 = vunpack.c.0.s8 %v1129
    %v1131 = vlaneseq
    %v1132 = vshrl.u32 %v1131, 7
    %v1133 = vsub.s32 %v1130, %v1132
    %v1134 = vrot.slane %v1119, %v1133
    %v1136 = vunpack.c.l.s4 1966171168
    %v1137 = vunpack.c.0.s8 %v1136
    %v1138 = vlaneseq
    %v1139 = vshrl.u32 %v1138, 7
    %v1140 = vsub.s32 %v1137, %v1139
    %v1141 = vrot.slane %v1120, %v1140
    %v1142 = vcombine.high %v1127, %v1127
    %v1143 = vcombine.high %v1141, %v1141
    %v1144 = vlaneseq
    %v1145 = vshrl.u32 %v1144, 7
    %v1146 = vsub.s32 0, %v1145
    %v1147 = vrot.slane %v1127, %v1146
    %v1148 = vlaneseq
    %v1149 = vshrl.u32 %v1148, 7
    %v1150 = vsub.s32 0, %v1149
    %v1151 = vrot.slane %v1141, %v1150
    %v1152 = vlaneseq
    %v1153 = vshrl.u32 %v1152, 7
    %v1154 = vsub.s32 0, %v1153
    %v1155 = vrot.slane %v1142, %v1154
    %v1156 = vlaneseq
    %v1157 = vshrl.u32 %v1156, 7
    %v1158 = vsub.s32 0, %v1157
    %v1159 = vrot.slane %v1143, %v1158
    %v1160 = vlaneseq
    %v1161 = vshrl.u32 %v1160, 7
    %v1162 = vsub.s32 0, %v1161
    %v1163 = vrot.slane %v1134, %v1162
    %v1169 = vmul.f32 %v26, %v1147
    %v1170 = vmul.f32 %v27, %v1151
    %v1171 = vmul.f32 %v28, %v1155
    %v1172 = vmul.f32 %v29, %v1159
    %v1173 = vmul.f32 %v30, %v1163
    %v1174 = vsel %vm116, %v1169, 0.0
    %v1175 = vsel %vm116, %v1170, 0.0
    %v1176 = vadd.f32 %v1174, %v1175
    %v1177 = vsel %vm116, %v1171, 0.0
    %v1178 = vadd.f32 %v1176, %v1177
    %v1179 = vsel %vm116, %v1172, 0.0
    %v1180 = vadd.f32 %v1178, %v1179
    %v1181 = vsel %vm116, %v1173, 0.0
    %v1182 = vadd.f32 %v1180, %v1181
    %v1183 = vmul.f32 %v1182, %v982
    %v1184 = vsel %vm116, %v1183, 0.0
    %v1185 = vrot.slane %v1184, 4
    %v1186 = vadd.f32 %v1184, %v1185
    %v1187 = vrot.slane %v1186, 2
    %v1188 = vadd.f32 %v1186, %v1187
    %v1189 = vrot.slane %v1188, 1
    %v1190 = vadd.f32 %v1188, %v1189
    %v1191 = vadd.f32 %v1103, %v1190
    %v1192 = vmul.f32 %v1191, %v38
    %v1194 = vcombine.high %v1192, %v1192
    %v1196 = vunpack.c.l.s4 1966171168
    %v1197 = vunpack.c.0.s8 %v1196
    %v1198 = vlaneseq
    %v1199 = vshrl.u32 %v1198, 7
    %v1200 = vsub.s32 %v1197, %v1199
    %v1201 = vrot.slane %v1194, %v1200
    %v1203 = vunpack.c.l.s4 1966171168
    %v1204 = vunpack.c.0.s8 %v1203
    %v1205 = vlaneseq
    %v1206 = vshrl.u32 %v1205, 7
    %v1207 = vsub.s32 %v1204, %v1206
    %v1208 = vrot.slane %v1201, %v1207
    %v1210 = vadd.f32 %v973, %v1208
    %s1211 = scalar_lea.vmem %s0, 40
    %v1212 = vld [vmem:[%s1211] sm:$0x1f]
    %v1213 = vlaneseq
    %v1214 = vshrl.u32 %v1213, 7
    %v1215 = vsub.s32 5, %v1214
    %v1216 = vrot.slane %v34, %v1215
    %vm1217 = vcmp.eq.s32.totalorder %v25, %v1216
    %v1218 = vsel %vm1217, 1, 0
    %v1219 = vcvt.s32.f32 %v1218
    %v1221 = vcombine.high %v1095, %v1095
    %v1223 = vunpack.c.l.s4 1966171168
    %v1224 = vunpack.c.0.s8 %v1223
    %v1225 = vlaneseq
    %v1226 = vshrl.u32 %v1225, 7
    %v1227 = vsub.s32 %v1224, %v1226
    %v1228 = vrot.slane %v1095, %v1227
    %v1230 = vunpack.c.l.s4 1966171168
    %v1231 = vunpack.c.0.s8 %v1230
    %v1232 = vlaneseq
    %v1233 = vshrl.u32 %v1232, 7
    %v1234 = vsub.s32 %v1231, %v1233
    %v1235 = vrot.slane %v1221, %v1234
    %v1236 = vcombine.high %v1228, %v1228
    %v1238 = vunpack.c.l.s4 1966171168
    %v1239 = vunpack.c.0.s8 %v1238
    %v1240 = vlaneseq
    %v1241 = vshrl.u32 %v1240, 7
    %v1242 = vsub.s32 %v1239, %v1241
    %v1243 = vrot.slane %v1228, %v1242
    %v1245 = vunpack.c.l.s4 1966171168
    %v1246 = vunpack.c.0.s8 %v1245
    %v1247 = vlaneseq
    %v1248 = vshrl.u32 %v1247, 7
    %v1249 = vsub.s32 %v1246, %v1248
    %v1250 = vrot.slane %v1235, %v1249
    %v1252 = vunpack.c.l.s4 1966171168
    %v1253 = vunpack.c.0.s8 %v1252
    %v1254 = vlaneseq
    %v1255 = vshrl.u32 %v1254, 7
    %v1256 = vsub.s32 %v1253, %v1255
    %v1257 = vrot.slane %v1236, %v1256
    %v1258 = vcombine.high %v1243, %v1243
    %v1259 = vcombine.high %v1257, %v1257
    %v1260 = vlaneseq
    %v1261 = vshrl.u32 %v1260, 7
    %v1262 = vsub.s32 0, %v1261
    %v1263 = vrot.slane %v1243, %v1262
    %v1264 = vlaneseq
    %v1265 = vshrl.u32 %v1264, 7
    %v1266 = vsub.s32 0, %v1265
    %v1267 = vrot.slane %v1257, %v1266
    %v1268 = vlaneseq
    %v1269 = vshrl.u32 %v1268, 7
    %v1270 = vsub.s32 0, %v1269
    %v1271 = vrot.slane %v1258, %v1270
    %v1272 = vlaneseq
    %v1273 = vshrl.u32 %v1272, 7
    %v1274 = vsub.s32 0, %v1273
    %v1275 = vrot.slane %v1259, %v1274
    %v1276 = vlaneseq
    %v1277 = vshrl.u32 %v1276, 7
    %v1278 = vsub.s32 0, %v1277
    %v1279 = vrot.slane %v1250, %v1278
    %v1285 = vadd.f32 %v1263, %v26
    %v1286 = vadd.f32 %v1267, %v27
    %v1287 = vadd.f32 %v1271, %v28
    %v1288 = vadd.f32 %v1275, %v29
    %v1289 = vadd.f32 %v1279, %v30
    %v1290 = vsel %vm116, %v1285, -inf
    %v1291 = vsel %vm116, %v1286, -inf
    %v1292 = vsel %vm116, %v1287, -inf
    %v1293 = vsel %vm116, %v1288, -inf
    %v1294 = vsel %vm116, %v1289, -inf
    %v1295 = vmax.f32 %v1290, %v1294
    %v1296 = vmax.f32 %v1295, %v1291
    %v1297 = vmax.f32 %v1292, %v1293
    %v1298 = vmax.f32 %v1296, %v1297
    %v1299 = vadd.f32 %v1212, %v1298
    %v1300 = vsub.f32 %v1285, %v1298
    %v1301 = vsub.f32 %v1286, %v1298
    %v1302 = vsub.f32 %v1287, %v1298
    %v1303 = vsub.f32 %v1288, %v1298
    %v1304 = vsub.f32 %v1289, %v1298
    %v1305 = vmul.f32 %v1300, 1.442695
    %v1306 = vpow.pop %v1305
    %v1307 = vmul.f32 %v1301, 1.442695
    %v1308 = vpow.pop %v1307
    %v1309 = vmul.f32 %v1302, 1.442695
    %v1310 = vpow.pop %v1309
    %v1311 = vmul.f32 %v1303, 1.442695
    %v1312 = vpow.pop %v1311
    %v1313 = vmul.f32 %v1304, 1.442695
    %v1314 = vpow.pop %v1313
    %v1315 = vsel %vm116, %v1306, 0.0
    %v1316 = vsel %vm116, %v1308, 0.0
    %v1317 = vadd.f32 %v1315, %v1316
    %v1318 = vsel %vm116, %v1310, 0.0
    %v1319 = vadd.f32 %v1317, %v1318
    %v1320 = vsel %vm116, %v1312, 0.0
    %v1321 = vadd.f32 %v1319, %v1320
    %v1322 = vsel %vm116, %v1314, 0.0
    %v1323 = vadd.f32 %v1321, %v1322
    %v1324 = vlog2.pop %v1323
    %v1325 = vmul.f32 %v1324, 0.6931472
    %v1326 = vadd.f32 %v1299, %v1325
    %v1327 = vlaneseq
    %v1328 = vshrl.u32 %v1327, 7
    %v1329 = vsub.s32 5, %v1328
    %v1330 = vrot.slane %v37, %v1329
    %vm1331 = vcmp.eq.s32.totalorder %v1330, 1
    %v1332 = vsel %vm1331, %v1326, %v1095
    %v1333 = vmul.f32 %v1212, %v1219
    %v1334 = vsel %vm116, %v1333, 0.0
    %v1335 = vrot.slane %v1334, 4
    %v1336 = vadd.f32 %v1334, %v1335
    %v1337 = vrot.slane %v1336, 2
    %v1338 = vadd.f32 %v1336, %v1337
    %v1339 = vrot.slane %v1338, 1
    %v1340 = vadd.f32 %v1338, %v1339
    %v1342 = vcombine.high %v982, %v982
    %v1344 = vunpack.c.l.s4 1966171168
    %v1345 = vunpack.c.0.s8 %v1344
    %v1346 = vlaneseq
    %v1347 = vshrl.u32 %v1346, 7
    %v1348 = vsub.s32 %v1345, %v1347
    %v1349 = vrot.slane %v982, %v1348
    %v1351 = vunpack.c.l.s4 1966171168
    %v1352 = vunpack.c.0.s8 %v1351
    %v1353 = vlaneseq
    %v1354 = vshrl.u32 %v1353, 7
    %v1355 = vsub.s32 %v1352, %v1354
    %v1356 = vrot.slane %v1342, %v1355
    %v1357 = vcombine.high %v1349, %v1349
    %v1359 = vunpack.c.l.s4 1966171168
    %v1360 = vunpack.c.0.s8 %v1359
    %v1361 = vlaneseq
    %v1362 = vshrl.u32 %v1361, 7
    %v1363 = vsub.s32 %v1360, %v1362
    %v1364 = vrot.slane %v1349, %v1363
    %v1366 = vunpack.c.l.s4 1966171168
    %v1367 = vunpack.c.0.s8 %v1366
    %v1368 = vlaneseq
    %v1369 = vshrl.u32 %v1368, 7
    %v1370 = vsub.s32 %v1367, %v1369
    %v1371 = vrot.slane %v1356, %v1370
    %v1373 = vunpack.c.l.s4 1966171168
    %v1374 = vunpack.c.0.s8 %v1373
    %v1375 = vlaneseq
    %v1376 = vshrl.u32 %v1375, 7
    %v1377 = vsub.s32 %v1374, %v1376
    %v1378 = vrot.slane %v1357, %v1377
    %v1379 = vcombine.high %v1364, %v1364
    %v1380 = vcombine.high %v1378, %v1378
    %v1381 = vlaneseq
    %v1382 = vshrl.u32 %v1381, 7
    %v1383 = vsub.s32 0, %v1382
    %v1384 = vrot.slane %v1364, %v1383
    %v1385 = vlaneseq
    %v1386 = vshrl.u32 %v1385, 7
    %v1387 = vsub.s32 0, %v1386
    %v1388 = vrot.slane %v1378, %v1387
    %v1389 = vlaneseq
    %v1390 = vshrl.u32 %v1389, 7
    %v1391 = vsub.s32 0, %v1390
    %v1392 = vrot.slane %v1379, %v1391
    %v1393 = vlaneseq
    %v1394 = vshrl.u32 %v1393, 7
    %v1395 = vsub.s32 0, %v1394
    %v1396 = vrot.slane %v1380, %v1395
    %v1397 = vlaneseq
    %v1398 = vshrl.u32 %v1397, 7
    %v1399 = vsub.s32 0, %v1398
    %v1400 = vrot.slane %v1371, %v1399
    %v1406 = vmul.f32 %v26, %v1384
    %v1407 = vmul.f32 %v27, %v1388
    %v1408 = vmul.f32 %v28, %v1392
    %v1409 = vmul.f32 %v29, %v1396
    %v1410 = vmul.f32 %v30, %v1400
    %v1411 = vsel %vm116, %v1406, 0.0
    %v1412 = vsel %vm116, %v1407, 0.0
    %v1413 = vadd.f32 %v1411, %v1412
    %v1414 = vsel %vm116, %v1408, 0.0
    %v1415 = vadd.f32 %v1413, %v1414
    %v1416 = vsel %vm116, %v1409, 0.0
    %v1417 = vadd.f32 %v1415, %v1416
    %v1418 = vsel %vm116, %v1410, 0.0
    %v1419 = vadd.f32 %v1417, %v1418
    %v1420 = vmul.f32 %v1419, %v1219
    %v1421 = vsel %vm116, %v1420, 0.0
    %v1422 = vrot.slane %v1421, 4
    %v1423 = vadd.f32 %v1421, %v1422
    %v1424 = vrot.slane %v1423, 2
    %v1425 = vadd.f32 %v1423, %v1424
    %v1426 = vrot.slane %v1425, 1
    %v1427 = vadd.f32 %v1425, %v1426
    %v1428 = vadd.f32 %v1340, %v1427
    %v1429 = vmul.f32 %v1428, %v38
    %v1431 = vcombine.high %v1429, %v1429
    %v1433 = vunpack.c.l.s4 1966171168
    %v1434 = vunpack.c.0.s8 %v1433
    %v1435 = vlaneseq
    %v1436 = vshrl.u32 %v1435, 7
    %v1437 = vsub.s32 %v1434, %v1436
    %v1438 = vrot.slane %v1431, %v1437
    %v1439 = vcombine.high %v1438, %v1438
    %v1441 = vunpack.c.l.s4 1966171168
    %v1442 = vunpack.c.0.s8 %v1441
    %v1443 = vlaneseq
    %v1444 = vshrl.u32 %v1443, 7
    %v1445 = vsub.s32 %v1442, %v1444
    %v1446 = vrot.slane %v1439, %v1445
    %v1448 = vadd.f32 %v1210, %v1446
    %s1449 = scalar_lea.vmem %s0, 48
    %v1450 = vld [vmem:[%s1449] sm:$0x1f]
    %v1451 = vlaneseq
    %v1452 = vshrl.u32 %v1451, 7
    %v1453 = vsub.s32 6, %v1452
    %v1454 = vrot.slane %v34, %v1453
    %vm1455 = vcmp.eq.s32.totalorder %v25, %v1454
    %v1456 = vsel %vm1455, 1, 0
    %v1457 = vcvt.s32.f32 %v1456
    %v1459 = vcombine.high %v1332, %v1332
    %v1461 = vunpack.c.l.s4 1966171168
    %v1462 = vunpack.c.0.s8 %v1461
    %v1463 = vlaneseq
    %v1464 = vshrl.u32 %v1463, 7
    %v1465 = vsub.s32 %v1462, %v1464
    %v1466 = vrot.slane %v1332, %v1465
    %v1468 = vunpack.c.l.s4 1966171168
    %v1469 = vunpack.c.0.s8 %v1468
    %v1470 = vlaneseq
    %v1471 = vshrl.u32 %v1470, 7
    %v1472 = vsub.s32 %v1469, %v1471
    %v1473 = vrot.slane %v1459, %v1472
    %v1474 = vcombine.high %v1466, %v1466
    %v1476 = vunpack.c.l.s4 1966171168
    %v1477 = vunpack.c.0.s8 %v1476
    %v1478 = vlaneseq
    %v1479 = vshrl.u32 %v1478, 7
    %v1480 = vsub.s32 %v1477, %v1479
    %v1481 = vrot.slane %v1466, %v1480
    %v1483 = vunpack.c.l.s4 1966171168
    %v1484 = vunpack.c.0.s8 %v1483
    %v1485 = vlaneseq
    %v1486 = vshrl.u32 %v1485, 7
    %v1487 = vsub.s32 %v1484, %v1486
    %v1488 = vrot.slane %v1473, %v1487
    %v1490 = vunpack.c.l.s4 1966171168
    %v1491 = vunpack.c.0.s8 %v1490
    %v1492 = vlaneseq
    %v1493 = vshrl.u32 %v1492, 7
    %v1494 = vsub.s32 %v1491, %v1493
    %v1495 = vrot.slane %v1474, %v1494
    %v1496 = vcombine.high %v1481, %v1481
    %v1497 = vcombine.high %v1495, %v1495
    %v1498 = vlaneseq
    %v1499 = vshrl.u32 %v1498, 7
    %v1500 = vsub.s32 0, %v1499
    %v1501 = vrot.slane %v1481, %v1500
    %v1502 = vlaneseq
    %v1503 = vshrl.u32 %v1502, 7
    %v1504 = vsub.s32 0, %v1503
    %v1505 = vrot.slane %v1495, %v1504
    %v1506 = vlaneseq
    %v1507 = vshrl.u32 %v1506, 7
    %v1508 = vsub.s32 0, %v1507
    %v1509 = vrot.slane %v1496, %v1508
    %v1510 = vlaneseq
    %v1511 = vshrl.u32 %v1510, 7
    %v1512 = vsub.s32 0, %v1511
    %v1513 = vrot.slane %v1497, %v1512
    %v1514 = vlaneseq
    %v1515 = vshrl.u32 %v1514, 7
    %v1516 = vsub.s32 0, %v1515
    %v1517 = vrot.slane %v1488, %v1516
    %v1523 = vadd.f32 %v1501, %v26
    %v1524 = vadd.f32 %v1505, %v27
    %v1525 = vadd.f32 %v1509, %v28
    %v1526 = vadd.f32 %v1513, %v29
    %v1527 = vadd.f32 %v1517, %v30
    %v1528 = vsel %vm116, %v1523, -inf
    %v1529 = vsel %vm116, %v1524, -inf
    %v1530 = vsel %vm116, %v1525, -inf
    %v1531 = vsel %vm116, %v1526, -inf
    %v1532 = vsel %vm116, %v1527, -inf
    %v1533 = vmax.f32 %v1528, %v1532
    %v1534 = vmax.f32 %v1533, %v1529
    %v1535 = vmax.f32 %v1530, %v1531
    %v1536 = vmax.f32 %v1534, %v1535
    %v1537 = vadd.f32 %v1450, %v1536
    %v1538 = vsub.f32 %v1523, %v1536
    %v1539 = vsub.f32 %v1524, %v1536
    %v1540 = vsub.f32 %v1525, %v1536
    %v1541 = vsub.f32 %v1526, %v1536
    %v1542 = vsub.f32 %v1527, %v1536
    %v1543 = vmul.f32 %v1538, 1.442695
    %v1544 = vpow.pop %v1543
    %v1545 = vmul.f32 %v1539, 1.442695
    %v1546 = vpow.pop %v1545
    %v1547 = vmul.f32 %v1540, 1.442695
    %v1548 = vpow.pop %v1547
    %v1549 = vmul.f32 %v1541, 1.442695
    %v1550 = vpow.pop %v1549
    %v1551 = vmul.f32 %v1542, 1.442695
    %v1552 = vpow.pop %v1551
    %v1553 = vsel %vm116, %v1544, 0.0
    %v1554 = vsel %vm116, %v1546, 0.0
    %v1555 = vadd.f32 %v1553, %v1554
    %v1556 = vsel %vm116, %v1548, 0.0
    %v1557 = vadd.f32 %v1555, %v1556
    %v1558 = vsel %vm116, %v1550, 0.0
    %v1559 = vadd.f32 %v1557, %v1558
    %v1560 = vsel %vm116, %v1552, 0.0
    %v1561 = vadd.f32 %v1559, %v1560
    %v1562 = vlog2.pop %v1561
    %v1563 = vmul.f32 %v1562, 0.6931472
    %v1564 = vadd.f32 %v1537, %v1563
    %v1565 = vlaneseq
    %v1566 = vshrl.u32 %v1565, 7
    %v1567 = vsub.s32 6, %v1566
    %v1568 = vrot.slane %v37, %v1567
    %vm1569 = vcmp.eq.s32.totalorder %v1568, 1
    %v1570 = vsel %vm1569, %v1564, %v1332
    %v1571 = vmul.f32 %v1450, %v1457
    %v1572 = vsel %vm116, %v1571, 0.0
    %v1573 = vrot.slane %v1572, 4
    %v1574 = vadd.f32 %v1572, %v1573
    %v1575 = vrot.slane %v1574, 2
    %v1576 = vadd.f32 %v1574, %v1575
    %v1577 = vrot.slane %v1576, 1
    %v1578 = vadd.f32 %v1576, %v1577
    %v1580 = vcombine.high %v1219, %v1219
    %v1582 = vunpack.c.l.s4 1966171168
    %v1583 = vunpack.c.0.s8 %v1582
    %v1584 = vlaneseq
    %v1585 = vshrl.u32 %v1584, 7
    %v1586 = vsub.s32 %v1583, %v1585
    %v1587 = vrot.slane %v1219, %v1586
    %v1589 = vunpack.c.l.s4 1966171168
    %v1590 = vunpack.c.0.s8 %v1589
    %v1591 = vlaneseq
    %v1592 = vshrl.u32 %v1591, 7
    %v1593 = vsub.s32 %v1590, %v1592
    %v1594 = vrot.slane %v1580, %v1593
    %v1595 = vcombine.high %v1587, %v1587
    %v1597 = vunpack.c.l.s4 1966171168
    %v1598 = vunpack.c.0.s8 %v1597
    %v1599 = vlaneseq
    %v1600 = vshrl.u32 %v1599, 7
    %v1601 = vsub.s32 %v1598, %v1600
    %v1602 = vrot.slane %v1587, %v1601
    %v1604 = vunpack.c.l.s4 1966171168
    %v1605 = vunpack.c.0.s8 %v1604
    %v1606 = vlaneseq
    %v1607 = vshrl.u32 %v1606, 7
    %v1608 = vsub.s32 %v1605, %v1607
    %v1609 = vrot.slane %v1594, %v1608
    %v1611 = vunpack.c.l.s4 1966171168
    %v1612 = vunpack.c.0.s8 %v1611
    %v1613 = vlaneseq
    %v1614 = vshrl.u32 %v1613, 7
    %v1615 = vsub.s32 %v1612, %v1614
    %v1616 = vrot.slane %v1595, %v1615
    %v1617 = vcombine.high %v1602, %v1602
    %v1618 = vcombine.high %v1616, %v1616
    %v1619 = vlaneseq
    %v1620 = vshrl.u32 %v1619, 7
    %v1621 = vsub.s32 0, %v1620
    %v1622 = vrot.slane %v1602, %v1621
    %v1623 = vlaneseq
    %v1624 = vshrl.u32 %v1623, 7
    %v1625 = vsub.s32 0, %v1624
    %v1626 = vrot.slane %v1616, %v1625
    %v1627 = vlaneseq
    %v1628 = vshrl.u32 %v1627, 7
    %v1629 = vsub.s32 0, %v1628
    %v1630 = vrot.slane %v1617, %v1629
    %v1631 = vlaneseq
    %v1632 = vshrl.u32 %v1631, 7
    %v1633 = vsub.s32 0, %v1632
    %v1634 = vrot.slane %v1618, %v1633
    %v1635 = vlaneseq
    %v1636 = vshrl.u32 %v1635, 7
    %v1637 = vsub.s32 0, %v1636
    %v1638 = vrot.slane %v1609, %v1637
    %v1644 = vmul.f32 %v26, %v1622
    %v1645 = vmul.f32 %v27, %v1626
    %v1646 = vmul.f32 %v28, %v1630
    %v1647 = vmul.f32 %v29, %v1634
    %v1648 = vmul.f32 %v30, %v1638
    %v1649 = vsel %vm116, %v1644, 0.0
    %v1650 = vsel %vm116, %v1645, 0.0
    %v1651 = vadd.f32 %v1649, %v1650
    %v1652 = vsel %vm116, %v1646, 0.0
    %v1653 = vadd.f32 %v1651, %v1652
    %v1654 = vsel %vm116, %v1647, 0.0
    %v1655 = vadd.f32 %v1653, %v1654
    %v1656 = vsel %vm116, %v1648, 0.0
    %v1657 = vadd.f32 %v1655, %v1656
    %v1658 = vmul.f32 %v1657, %v1457
    %v1659 = vsel %vm116, %v1658, 0.0
    %v1660 = vrot.slane %v1659, 4
    %v1661 = vadd.f32 %v1659, %v1660
    %v1662 = vrot.slane %v1661, 2
    %v1663 = vadd.f32 %v1661, %v1662
    %v1664 = vrot.slane %v1663, 1
    %v1665 = vadd.f32 %v1663, %v1664
    %v1666 = vadd.f32 %v1578, %v1665
    %v1667 = vmul.f32 %v1666, %v38
    %v1669 = vcombine.high %v1667, %v1667
    %v1671 = vunpack.c.l.s4 1966171168
    %v1672 = vunpack.c.0.s8 %v1671
    %v1673 = vlaneseq
    %v1674 = vshrl.u32 %v1673, 7
    %v1675 = vsub.s32 %v1672, %v1674
    %v1676 = vrot.slane %v1669, %v1675
    %v1678 = vunpack.c.l.s4 1966171168
    %v1679 = vunpack.c.0.s8 %v1678
    %v1680 = vlaneseq
    %v1681 = vshrl.u32 %v1680, 7
    %v1682 = vsub.s32 %v1679, %v1681
    %v1683 = vrot.slane %v1676, %v1682
    %v1684 = vcombine.high %v1683, %v1683
    %v1686 = vadd.f32 %v1448, %v1684
    %s1687 = scalar_lea.vmem %s0, 56
    %v1688 = vld [vmem:[%s1687] sm:$0x1f]
    %v1689 = vlaneseq
    %v1690 = vshrl.u32 %v1689, 7
    %v1691 = vsub.s32 7, %v1690
    %v1692 = vrot.slane %v34, %v1691
    %vm1693 = vcmp.eq.s32.totalorder %v25, %v1692
    %v1694 = vsel %vm1693, 1, 0
    %v1695 = vcvt.s32.f32 %v1694
    %v1697 = vcombine.high %v1570, %v1570
    %v1699 = vunpack.c.l.s4 1966171168
    %v1700 = vunpack.c.0.s8 %v1699
    %v1701 = vlaneseq
    %v1702 = vshrl.u32 %v1701, 7
    %v1703 = vsub.s32 %v1700, %v1702
    %v1704 = vrot.slane %v1570, %v1703
    %v1706 = vunpack.c.l.s4 1966171168
    %v1707 = vunpack.c.0.s8 %v1706
    %v1708 = vlaneseq
    %v1709 = vshrl.u32 %v1708, 7
    %v1710 = vsub.s32 %v1707, %v1709
    %v1711 = vrot.slane %v1697, %v1710
    %v1712 = vcombine.high %v1704, %v1704
    %v1714 = vunpack.c.l.s4 1966171168
    %v1715 = vunpack.c.0.s8 %v1714
    %v1716 = vlaneseq
    %v1717 = vshrl.u32 %v1716, 7
    %v1718 = vsub.s32 %v1715, %v1717
    %v1719 = vrot.slane %v1704, %v1718
    %v1721 = vunpack.c.l.s4 1966171168
    %v1722 = vunpack.c.0.s8 %v1721
    %v1723 = vlaneseq
    %v1724 = vshrl.u32 %v1723, 7
    %v1725 = vsub.s32 %v1722, %v1724
    %v1726 = vrot.slane %v1711, %v1725
    %v1728 = vunpack.c.l.s4 1966171168
    %v1729 = vunpack.c.0.s8 %v1728
    %v1730 = vlaneseq
    %v1731 = vshrl.u32 %v1730, 7
    %v1732 = vsub.s32 %v1729, %v1731
    %v1733 = vrot.slane %v1712, %v1732
    %v1734 = vcombine.high %v1719, %v1719
    %v1735 = vcombine.high %v1733, %v1733
    %v1736 = vlaneseq
    %v1737 = vshrl.u32 %v1736, 7
    %v1738 = vsub.s32 0, %v1737
    %v1739 = vrot.slane %v1719, %v1738
    %v1740 = vlaneseq
    %v1741 = vshrl.u32 %v1740, 7
    %v1742 = vsub.s32 0, %v1741
    %v1743 = vrot.slane %v1733, %v1742
    %v1744 = vlaneseq
    %v1745 = vshrl.u32 %v1744, 7
    %v1746 = vsub.s32 0, %v1745
    %v1747 = vrot.slane %v1734, %v1746
    %v1748 = vlaneseq
    %v1749 = vshrl.u32 %v1748, 7
    %v1750 = vsub.s32 0, %v1749
    %v1751 = vrot.slane %v1735, %v1750
    %v1752 = vlaneseq
    %v1753 = vshrl.u32 %v1752, 7
    %v1754 = vsub.s32 0, %v1753
    %v1755 = vrot.slane %v1726, %v1754
    %v1761 = vadd.f32 %v1739, %v26
    %v1762 = vadd.f32 %v1743, %v27
    %v1763 = vadd.f32 %v1747, %v28
    %v1764 = vadd.f32 %v1751, %v29
    %v1765 = vadd.f32 %v1755, %v30
    %v1766 = vsel %vm116, %v1761, -inf
    %v1767 = vsel %vm116, %v1762, -inf
    %v1768 = vsel %vm116, %v1763, -inf
    %v1769 = vsel %vm116, %v1764, -inf
    %v1770 = vsel %vm116, %v1765, -inf
    %v1771 = vmax.f32 %v1766, %v1770
    %v1772 = vmax.f32 %v1771, %v1767
    %v1773 = vmax.f32 %v1768, %v1769
    %v1774 = vmax.f32 %v1772, %v1773
    %v1775 = vadd.f32 %v1688, %v1774
    %v1776 = vsub.f32 %v1761, %v1774
    %v1777 = vsub.f32 %v1762, %v1774
    %v1778 = vsub.f32 %v1763, %v1774
    %v1779 = vsub.f32 %v1764, %v1774
    %v1780 = vsub.f32 %v1765, %v1774
    %v1781 = vmul.f32 %v1776, 1.442695
    %v1782 = vpow.pop %v1781
    %v1783 = vmul.f32 %v1777, 1.442695
    %v1784 = vpow.pop %v1783
    %v1785 = vmul.f32 %v1778, 1.442695
    %v1786 = vpow.pop %v1785
    %v1787 = vmul.f32 %v1779, 1.442695
    %v1788 = vpow.pop %v1787
    %v1789 = vmul.f32 %v1780, 1.442695
    %v1790 = vpow.pop %v1789
    %v1791 = vsel %vm116, %v1782, 0.0
    %v1792 = vsel %vm116, %v1784, 0.0
    %v1793 = vadd.f32 %v1791, %v1792
    %v1794 = vsel %vm116, %v1786, 0.0
    %v1795 = vadd.f32 %v1793, %v1794
    %v1796 = vsel %vm116, %v1788, 0.0
    %v1797 = vadd.f32 %v1795, %v1796
    %v1798 = vsel %vm116, %v1790, 0.0
    %v1799 = vadd.f32 %v1797, %v1798
    %v1800 = vlog2.pop %v1799
    %v1801 = vmul.f32 %v1800, 0.6931472
    %v1802 = vadd.f32 %v1775, %v1801
    %v1803 = vlaneseq
    %v1804 = vshrl.u32 %v1803, 7
    %v1805 = vsub.s32 7, %v1804
    %v1806 = vrot.slane %v37, %v1805
    %vm1807 = vcmp.eq.s32.totalorder %v1806, 1
    %v1808 = vsel %vm1807, %v1802, %v1570
    %v1809 = vmul.f32 %v1688, %v1695
    %v1810 = vsel %vm116, %v1809, 0.0
    %v1811 = vrot.slane %v1810, 4
    %v1812 = vadd.f32 %v1810, %v1811
    %v1813 = vrot.slane %v1812, 2
    %v1814 = vadd.f32 %v1812, %v1813
    %v1815 = vrot.slane %v1814, 1
    %v1816 = vadd.f32 %v1814, %v1815
    %v1818 = vcombine.high %v1457, %v1457
    %v1820 = vunpack.c.l.s4 1966171168
    %v1821 = vunpack.c.0.s8 %v1820
    %v1822 = vlaneseq
    %v1823 = vshrl.u32 %v1822, 7
    %v1824 = vsub.s32 %v1821, %v1823
    %v1825 = vrot.slane %v1457, %v1824
    %v1827 = vunpack.c.l.s4 1966171168
    %v1828 = vunpack.c.0.s8 %v1827
    %v1829 = vlaneseq
    %v1830 = vshrl.u32 %v1829, 7
    %v1831 = vsub.s32 %v1828, %v1830
    %v1832 = vrot.slane %v1818, %v1831
    %v1833 = vcombine.high %v1825, %v1825
    %v1835 = vunpack.c.l.s4 1966171168
    %v1836 = vunpack.c.0.s8 %v1835
    %v1837 = vlaneseq
    %v1838 = vshrl.u32 %v1837, 7
    %v1839 = vsub.s32 %v1836, %v1838
    %v1840 = vrot.slane %v1825, %v1839
    %v1842 = vunpack.c.l.s4 1966171168
    %v1843 = vunpack.c.0.s8 %v1842
    %v1844 = vlaneseq
    %v1845 = vshrl.u32 %v1844, 7
    %v1846 = vsub.s32 %v1843, %v1845
    %v1847 = vrot.slane %v1832, %v1846
    %v1849 = vunpack.c.l.s4 1966171168
    %v1850 = vunpack.c.0.s8 %v1849
    %v1851 = vlaneseq
    %v1852 = vshrl.u32 %v1851, 7
    %v1853 = vsub.s32 %v1850, %v1852
    %v1854 = vrot.slane %v1833, %v1853
    %v1855 = vcombine.high %v1840, %v1840
    %v1856 = vcombine.high %v1854, %v1854
    %v1857 = vlaneseq
    %v1858 = vshrl.u32 %v1857, 7
    %v1859 = vsub.s32 0, %v1858
    %v1860 = vrot.slane %v1840, %v1859
    %v1861 = vlaneseq
    %v1862 = vshrl.u32 %v1861, 7
    %v1863 = vsub.s32 0, %v1862
    %v1864 = vrot.slane %v1854, %v1863
    %v1865 = vlaneseq
    %v1866 = vshrl.u32 %v1865, 7
    %v1867 = vsub.s32 0, %v1866
    %v1868 = vrot.slane %v1855, %v1867
    %v1869 = vlaneseq
    %v1870 = vshrl.u32 %v1869, 7
    %v1871 = vsub.s32 0, %v1870
    %v1872 = vrot.slane %v1856, %v1871
    %v1873 = vlaneseq
    %v1874 = vshrl.u32 %v1873, 7
    %v1875 = vsub.s32 0, %v1874
    %v1876 = vrot.slane %v1847, %v1875
    %v1882 = vmul.f32 %v26, %v1860
    %v1883 = vmul.f32 %v27, %v1864
    %v1884 = vmul.f32 %v28, %v1868
    %v1885 = vmul.f32 %v29, %v1872
    %v1886 = vmul.f32 %v30, %v1876
    %v1887 = vsel %vm116, %v1882, 0.0
    %v1888 = vsel %vm116, %v1883, 0.0
    %v1889 = vadd.f32 %v1887, %v1888
    %v1890 = vsel %vm116, %v1884, 0.0
    %v1891 = vadd.f32 %v1889, %v1890
    %v1892 = vsel %vm116, %v1885, 0.0
    %v1893 = vadd.f32 %v1891, %v1892
    %v1894 = vsel %vm116, %v1886, 0.0
    %v1895 = vadd.f32 %v1893, %v1894
    %v1896 = vmul.f32 %v1895, %v1695
    %v1897 = vsel %vm116, %v1896, 0.0
    %v1898 = vrot.slane %v1897, 4
    %v1899 = vadd.f32 %v1897, %v1898
    %v1900 = vrot.slane %v1899, 2
    %v1901 = vadd.f32 %v1899, %v1900
    %v1902 = vrot.slane %v1901, 1
    %v1903 = vadd.f32 %v1901, %v1902
    %v1904 = vadd.f32 %v1816, %v1903
    %v1905 = vmul.f32 %v1904, %v38
    %v1907 = vcombine.high %v1905, %v1905
    %v1909 = vunpack.c.l.s4 1966171168
    %v1910 = vunpack.c.0.s8 %v1909
    %v1911 = vlaneseq
    %v1912 = vshrl.u32 %v1911, 7
    %v1913 = vsub.s32 %v1910, %v1912
    %v1914 = vrot.slane %v1907, %v1913
    %v1915 = vcombine.high %v1914, %v1914
    %v1917 = vunpack.c.l.s4 1966171168
    %v1918 = vunpack.c.0.s8 %v1917
    %v1919 = vlaneseq
    %v1920 = vshrl.u32 %v1919, 7
    %v1921 = vsub.s32 %v1918, %v1920
    %v1922 = vrot.slane %v1915, %v1921
    %v1923 = vcombine.high %v1922, %v1922
    %v1925 = vadd.f32 %v1686, %v1923
    %1926 = vst.msk [vmem:[#allocation2] sm:$0x1f] %vm116, %v1808
    %vm1927 = vcmask 8192
    %1928 = vst.msk [vmem:[#allocation3] sm:$0x1] %vm1927, %v1925
    %1929 = vst.msk [vmem:[#allocation4] sm:$0x1f] %vm116, %v1695
    // Predicated region
    $region18: #{tpu_custom_call.1} parent=1 // pred_check
      %p1930 = pneg %p15
    $region19: #{tpu_custom_call.1} parent=1 // pred_check_branch
      %1932 = sbr.rel (%p1930) target = $region21
    $region20: #{tpu_custom_call.1} parent=1 // pred_region
      %v1933 = vsel %vm116, %v1808, -inf
      %v1934 = vrot.slane %v1933, 4
      %v1935 = vmax.f32 %v1933, %v1934
      %v1936 = vrot.slane %v1935, 2
      %v1937 = vmax.f32 %v1935, %v1936
      %v1938 = vrot.slane %v1937, 1
      %v1939 = vmax.f32 %v1937, %v1938
      %v1940 = vsub.f32 %v1808, %v1939
      %v1941 = vmul.f32 %v1940, 1.442695
      %v1942 = vpow.pop %v1941
      %v1943 = vsel %vm116, %v1942, 0.0
      %v1944 = vrot.slane %v1943, 4
      %v1945 = vadd.f32 %v1943, %v1944
      %v1946 = vrot.slane %v1945, 2
      %v1947 = vadd.f32 %v1945, %v1946
      %v1948 = vrot.slane %v1947, 1
      %v1949 = vadd.f32 %v1947, %v1948
      %v1950 = vlog2.pop %v1949
      %v1951 = vmul.f32 %v1950, 0.6931472
      %v1952 = vadd.f32 %v1939, %v1951
      %v1953 = vsub.f32 %v1925, %v1952
      %1954 = vst.msk [vmem:[#allocation5] sm:$0x1] %vm1927, %v1953
    $region21: #{tpu_custom_call.1} parent=1 // pred_fallthru
      _
    // Predicated region
    $region22: #{tpu_custom_call.1} parent=1 // pred_check
      _
    $region23: #{tpu_custom_call.1} parent=1 // pred_check_branch
      %1956 = sbr.rel (0) target = $region25
    $region24: #{tpu_custom_call.1} parent=1 // pred_region
      %s1958 = ssub.s32 16, 16
      %1959 = vsyncadd [#allocation6], %s1958
      %s1961 = sshll.u32 [#allocation5], 4
      %s1962 = int_to_ptr.vmem [resolvable:$true] %s1961
      %1964 = dma.vmem_to_hbm [thread:$0]  %s1962, 16, %s3, [#allocation6]
    $region25: #{tpu_custom_call.1} parent=1 // pred_fallthru
      _
    // Predicated region
    $region26: #{tpu_custom_call.1} parent=1 // pred_check
      _
    $region27: #{tpu_custom_call.1} parent=1 // pred_check_branch
      %1966 = sbr.rel (0) target = $region29
    $region28: #{tpu_custom_call.1} parent=1 // pred_region
      %1967 = dma.done [#allocation6], 16
    $region29: #{tpu_custom_call.1} parent=1 // pred_fallthru
      _
    %1968 = vsyncpa [#allocation6], 1

</llo_original>
